<compile_context>
chip_gen: v6e
topology: v6e:2x2x1
jax: 0.10.0
libtpu: 0.0.40
codegen_flags: <defaults>
</compile_context>

<pallas_src>
from typing import NamedTuple, Optional

import jax
import jax.numpy as jnp
from jax.experimental import pallas as pl
from jax.experimental.pallas import tpu as pltpu

_MIB = 1024 * 1024


# ----------------------------------------------------------------------------
# Module-config helper (mirrors FeedForward.__init__ exactly).
# ----------------------------------------------------------------------------
def _compute_hidden_dim(dim, hidden_dim=None, multiple_of=128,
                        ffn_dim_multiplier=None):
    if hidden_dim is None:
        hidden_dim = 4 * dim
    hidden_dim = int(2 * hidden_dim / 3)
    if ffn_dim_multiplier is not None:
        hidden_dim = int(ffn_dim_multiplier * hidden_dim)
    hidden_dim = multiple_of * ((hidden_dim + multiple_of - 1) // multiple_of)
    return hidden_dim


# ----------------------------------------------------------------------------
# Sizing helpers
# ----------------------------------------------------------------------------
def _round_up(x: int, m: int) -> int:
    return ((x + m - 1) // m) * m


def _vmem_capacity_bytes() -> int:
    try:
        return int(pltpu.get_tpu_info().vmem_capacity_bytes)
    except Exception:
        return 64 * _MIB  # conservative (v7x-sized) fallback


def _vmem_estimate(tm, th, dim, xbytes, wbytes, obytes) -> int:
    """Honest per-kernel VMEM footprint (double-buffered streams + intermediates)."""
    weights = 2 * 3 * dim * th * wbytes        # w1,w3 (dim,th) + w2 (th,dim), 2-deep
    x_tile = 2 * tm * dim * xbytes             # token tile, 2-deep
    o_tile = 2 * tm * dim * obytes             # output tile, 2-deep
    acc = tm * dim * 4                         # f32 accumulator scratch
    # in-kernel intermediates: x bf16 cast, h1 / sigmoid / gate / h3 in f32,
    # plus the bf16 cast fed to the down projection.
    inter = tm * dim * wbytes + tm * th * (4 * 4 + wbytes)
    margin = 2 * _MIB                          # Mosaic internal scratch
    return weights + x_tile + o_tile + acc + inter + margin


def _choose_th(dim, hidden, wbytes, budget, tm_probe=512) -> int:
    """Pick the hidden tile: large when VMEM allows, halved until it fits."""
    hidden_128 = _round_up(hidden, 128)
    target = 2048 if budget > 70 * _MIB else 512     # v5e/v6e vs v7x class
    th = max(128, (min(target, hidden_128) // 128) * 128)
    # Worst-case 4-byte activations when probing.
    while th > 128 and _vmem_estimate(tm_probe, th, dim, 4, wbytes, 4) > budget:
        th = max(128, ((th // 2) // 128) * 128)
    return th


# ----------------------------------------------------------------------------
# One-time weight preparation (parameter-load time, NOT the hot path).
# ----------------------------------------------------------------------------
class PreparedFFNWeights(NamedTuple):
    w1: jax.Array   # [dim, hidden_pad], compute dtype
    w3: jax.Array   # [dim, hidden_pad], compute dtype
    w2: jax.Array   # [hidden_pad, dim], compute dtype
    hidden: int     # original (unpadded) hidden dim
    th: int         # hidden tile used by the kernel (divides hidden_pad)


def prepare_ffn_weights(w1, w3, w2, *, th: Optional[int] = None,
                        compute_dtype=jnp.bfloat16) -> PreparedFFNWeights:
    """Cast weights to the MXU compute dtype and zero-pad the hidden dim so the
    kernel's hidden tile divides it exactly.  Call once at param-load time.

    Layout: w1/w3 are [dim, hidden], w2 is [hidden, dim] (i.e. already in
    x @ W layout; PyTorch's Linear stores W as [out, in] and uses x @ W.T).
    Zero-padded hidden columns/rows contribute exactly zero to the output.
    """
    dim, hidden = w1.shape
    assert w3.shape == (dim, hidden)
    assert w2.shape == (hidden, dim)

    wbytes = jnp.dtype(compute_dtype).itemsize
    budget = int(_vmem_capacity_bytes() * 0.85)
    if th is None:
        th = _choose_th(dim, hidden, wbytes, budget)
    th = max(128, (min(int(th), _round_up(hidden, 128)) // 128) * 128)

    hidden_pad = _round_up(hidden, th)
    pad = hidden_pad - hidden
    if pad:
        w1 = jnp.pad(w1, ((0, 0), (0, pad)))
        w3 = jnp.pad(w3, ((0, 0), (0, pad)))
        w2 = jnp.pad(w2, ((0, pad), (0, 0)))

    return PreparedFFNWeights(
        w1=w1.astype(compute_dtype),
        w3=w3.astype(compute_dtype),
        w2=w2.astype(compute_dtype),
        hidden=int(hidden),
        th=int(th),
    )


# ----------------------------------------------------------------------------
# Kernel
# ----------------------------------------------------------------------------
def _ffn_kernel(x_ref, w1_ref, w3_ref, w2_ref, o_ref, acc_ref):
    # x_ref:   (tm, dim)   token tile (resident across the hidden axis)
    # w1_ref:  (dim, th)   gate-projection tile (bf16)
    # w3_ref:  (dim, th)   up-projection tile (bf16)
    # w2_ref:  (th, dim)   down-projection tile (bf16)
    # o_ref:   (tm, dim)   output tile (resident across the hidden axis)
    # acc_ref: (tm, dim)   f32 accumulator scratch
    k = pl.program_id(1)

    @pl.when(k == 0)
    def _():
        acc_ref[...] = jnp.zeros_like(acc_ref)

    xb = x_ref[...].astype(w1_ref.dtype)

    # Gate projection + SiLU (sigmoid runs on the EUP slot and overlaps the
    # second MXU pass below).
    h1 = jnp.dot(xb, w1_ref[...], preferred_element_type=jnp.float32)
    g = h1 * jax.nn.sigmoid(h1)

    # Up projection.
    h3 = jnp.dot(xb, w3_ref[...], preferred_element_type=jnp.float32)

    # SwiGLU gating in f32, then down projection accumulated in f32.
    h = (g * h3).astype(w2_ref.dtype)
    acc_ref[...] += jnp.dot(h, w2_ref[...], preferred_element_type=jnp.float32)

    @pl.when(k == pl.num_programs(1) - 1)
    def _():
        o_ref[...] = acc_ref[...].astype(o_ref.dtype)


# ----------------------------------------------------------------------------
# Wrapper
# ----------------------------------------------------------------------------
def feed_forward_pallas(x, weights, *, tm: int = 512, out_dtype=None):
    """SwiGLU FFN forward.  x: [..., dim]; weights: PreparedFFNWeights
    (or a raw (w1, w3, w2) tuple, which is prepared on the fly — not for the
    hot loop)."""
    if not isinstance(weights, PreparedFFNWeights):
        weights = prepare_ffn_weights(*weights)

    orig_shape = x.shape
    dim = orig_shape[-1]
    hidden_pad = weights.w1.shape[1]
    th = weights.th
    assert weights.w1.shape == (dim, hidden_pad)
    assert weights.w3.shape == (dim, hidden_pad)
    assert weights.w2.shape == (hidden_pad, dim)
    assert hidden_pad % th == 0
    kt = hidden_pad // th

    out_dtype = x.dtype if out_dtype is None else out_dtype
    xbytes = jnp.dtype(x.dtype).itemsize
    wbytes = jnp.dtype(weights.w1.dtype).itemsize
    obytes = jnp.dtype(out_dtype).itemsize

    x2d = x.reshape(-1, dim)
    m = x2d.shape[0]

    vmem_cap = _vmem_capacity_bytes()
    budget = int(vmem_cap * 0.85)

    # Token tile: 128-aligned, halved until the honest VMEM footprint fits.
    tm_eff = max(128, (min(int(tm), _round_up(m, 128)) // 128) * 128)
    while tm_eff > 128 and _vmem_estimate(tm_eff, th, dim, xbytes, wbytes,
                                          obytes) > budget:
        tm_eff = max(128, ((tm_eff // 2) // 128) * 128)

    m_pad = _round_up(m, tm_eff)
    if m_pad != m:
        # Zero-padded token rows produce zeros and are sliced off below.
        x2d = jnp.pad(x2d, ((0, m_pad - m), (0, 0)))

    est = _vmem_estimate(tm_eff, th, dim, xbytes, wbytes, obytes)
    vmem_limit = int(min(budget, max(est + 8 * _MIB, 32 * _MIB)))

    n_tok_tiles = m_pad // tm_eff
    weight_bytes = 3 * dim * hidden_pad * wbytes   # re-streamed per token tile
    cost = pl.CostEstimate(
        flops=6 * m_pad * dim * hidden_pad,        # 3 matmuls
        transcendentals=m_pad * hidden_pad,        # sigmoid
        bytes_accessed=(m_pad * dim * xbytes       # x
                        + m_pad * dim * obytes     # out
                        + n_tok_tiles * weight_bytes))

    out = pl.pallas_call(
        _ffn_kernel,
        out_shape=jax.ShapeDtypeStruct((m_pad, dim), out_dtype),
        grid_spec=pltpu.PrefetchScalarGridSpec(
            num_scalar_prefetch=0,
            grid=(n_tok_tiles, kt),                       # (token tiles, hidden tiles)
            in_specs=[
                pl.BlockSpec((tm_eff, dim), lambda i, k: (i, 0)),   # x
                pl.BlockSpec((dim, th), lambda i, k: (0, k)),       # w1 (gate)
                pl.BlockSpec((dim, th), lambda i, k: (0, k)),       # w3 (up)
                pl.BlockSpec((th, dim), lambda i, k: (k, 0)),       # w2 (down)
            ],
            out_specs=pl.BlockSpec((tm_eff, dim), lambda i, k: (i, 0)),
            scratch_shapes=[pltpu.VMEM((tm_eff, dim), jnp.float32)],
        ),
        compiler_params=pltpu.CompilerParams(
            dimension_semantics=("parallel", "arbitrary"),
            vmem_limit_bytes=vmem_limit),
        cost_estimate=cost,
    )(x2d, weights.w1, weights.w3, weights.w2)

    if m_pad != m:
        out = out[:m]
    return out.reshape(orig_shape)


# ----------------------------------------------------------------------------
# Pure-JAX reference
# ----------------------------------------------------------------------------
def feed_forward_ref(x2d, w1, w3, w2):
    h1 = x2d @ w1
    h3 = x2d @ w3
    return ((h1 * jax.nn.sigmoid(h1)) * h3) @ w2


if __name__ == "__main__":
    dim = 128
    multiple_of = 128
    hidden_dim = _compute_hidden_dim(dim, None, multiple_of, None)  # -> 384

    batch, seq = 2, 8  # 16 tokens total (padded to one 128-row tile)

    key = jax.random.PRNGKey(0)
    kx, k1, k2, k3 = jax.random.split(key, 4)

    x = jax.random.normal(kx, (batch, seq, dim), dtype=jnp.float32)
    # Deterministic synthetic weights, stored [in, out], ~unit-variance outputs.
    w1 = jax.random.normal(k1, (dim, hidden_dim), dtype=jnp.float32) * (dim ** -0.5)
    w3 = jax.random.normal(k3, (dim, hidden_dim), dtype=jnp.float32) * (dim ** -0.5)
    w2 = jax.random.normal(k2, (hidden_dim, dim), dtype=jnp.float32) * (hidden_dim ** -0.5)

    # One-time weight prep (param-load time): bf16 cast + hidden padding.
    prepared = prepare_ffn_weights(w1, w3, w2)

    out = feed_forward_pallas(x, prepared)
    out = jax.block_until_ready(out)

    ref = feed_forward_ref(x.reshape(-1, dim), w1, w3, w2).reshape(x.shape)
    assert out.shape == x.shape
    # bf16 MXU operands (f32 accumulation) -> ~1% relative error vs f32 ref.
    assert jnp.allclose(out, ref, atol=8e-2, rtol=5e-2)

    print("KERNEL_OK")
</pallas_src>

<mosaic_0001>
module attributes {stable_mosaic.version = 11 : i64} {
  func.func @_ffn_kernel(%arg0: i32, %arg1: i32, %arg2: memref<128x128xf32, #tpu.memory_space<vmem>>, %arg3: memref<128x384xbf16, #tpu.memory_space<vmem>>, %arg4: memref<128x384xbf16, #tpu.memory_space<vmem>>, %arg5: memref<384x128xbf16, #tpu.memory_space<vmem>>, %arg6: memref<128x128xf32, #tpu.memory_space<vmem>>, %arg7: memref<128x128xf32, #tpu.memory_space<vmem>>) attributes {dimension_semantics = [#tpu.dimension_semantics<parallel>, #tpu.dimension_semantics<arbitrary>], iteration_bounds = array<i64: 1, 1>, scalar_prefetch = 0 : i64, scratch_operands = 1 : i64, tpu.core_type = #tpu.core_type<tc>, window_params = [{transform_indices = @transform_0, window_bounds = array<i64: 128, 128>}, {transform_indices = @transform_1, window_bounds = array<i64: 128, 384>}, {transform_indices = @transform_2, window_bounds = array<i64: 128, 384>}, {transform_indices = @transform_3, window_bounds = array<i64: 384, 128>}, {transform_indices = @transform_4, window_bounds = array<i64: 128, 128>}]} {
    %c0_i32 = arith.constant 0 : i32
    %0 = arith.cmpi eq, %arg1, %c0_i32 : i32
    %1 = arith.extui %0 : i1 to i32
    %c0_i32_0 = arith.constant 0 : i32
    %2 = arith.cmpi ne, %1, %c0_i32_0 : i32
    scf.if %2 {
      %cst_17 = arith.constant 0.000000e+00 : f32
      %25 = vector.broadcast %cst_17 : f32 to vector<128x128xf32>
      %c0_18 = arith.constant 0 : index
      %c0_19 = arith.constant 0 : index
      %26 = vector.load %arg7[%c0_18, %c0_19] : memref<128x128xf32, #tpu.memory_space<vmem>>, vector<128x128xf32>
      tpu.vector_store %arg7[%c0_18, %c0_19], %25 {strides = array<i32>} : memref<128x128xf32, #tpu.memory_space<vmem>>, vector<128x128xf32>,
    } else {
    }
    %c0 = arith.constant 0 : index
    %c0_1 = arith.constant 0 : index
    %3 = vector.load %arg2[%c0, %c0_1] : memref<128x128xf32, #tpu.memory_space<vmem>>, vector<128x128xf32>
    %4 = arith.truncf %3 : vector<128x128xf32> to vector<128x128xbf16>
    %c0_2 = arith.constant 0 : index
    %c0_3 = arith.constant 0 : index
    %5 = vector.load %arg3[%c0_2, %c0_3] : memref<128x384xbf16, #tpu.memory_space<vmem>>, vector<128x384xbf16>
    %cst = arith.constant dense<0.000000e+00> : vector<128x384xf32>
    %6 = tpu.matmul %4, %5, %cst {dimension_numbers = #tpu.dot_dimension_numbers<[1], [0], [0], [1], [0, 0, 1, 1], [], []>} : vector<128x128xbf16>, vector<128x384xbf16>, vector<128x384xf32> -> vector<128x384xf32>
    %7 = arith.negf %6 : vector<128x384xf32>
    %8 = math.exp %7 : vector<128x384xf32>
    %cst_4 = arith.constant 1.000000e+00 : f32
    %9 = vector.broadcast %cst_4 : f32 to vector<128x384xf32>
    %10 = arith.addf %9, %8 : vector<128x384xf32>
    %11 = arith.divf %9, %10 : vector<128x384xf32>
    %12 = arith.mulf %6, %11 : vector<128x384xf32>
    %c0_5 = arith.constant 0 : index
    %c0_6 = arith.constant 0 : index
    %13 = vector.load %arg4[%c0_5, %c0_6] : memref<128x384xbf16, #tpu.memory_space<vmem>>, vector<128x384xbf16>
    %cst_7 = arith.constant dense<0.000000e+00> : vector<128x384xf32>
    %14 = tpu.matmul %4, %13, %cst_7 {dimension_numbers = #tpu.dot_dimension_numbers<[1], [0], [0], [1], [0, 0, 1, 1], [], []>} : vector<128x128xbf16>, vector<128x384xbf16>, vector<128x384xf32> -> vector<128x384xf32>
    %15 = arith.mulf %12, %14 : vector<128x384xf32>
    %16 = arith.truncf %15 : vector<128x384xf32> to vector<128x384xbf16>
    %c0_8 = arith.constant 0 : index
    %c0_9 = arith.constant 0 : index
    %17 = vector.load %arg7[%c0_8, %c0_9] : memref<128x128xf32, #tpu.memory_space<vmem>>, vector<128x128xf32>
    %c0_10 = arith.constant 0 : index
    %c0_11 = arith.constant 0 : index
    %18 = vector.load %arg5[%c0_10, %c0_11] : memref<384x128xbf16, #tpu.memory_space<vmem>>, vector<384x128xbf16>
    %cst_12 = arith.constant dense<0.000000e+00> : vector<128x128xf32>
    %19 = tpu.matmul %16, %18, %cst_12 {dimension_numbers = #tpu.dot_dimension_numbers<[1], [0], [0], [1], [0, 0, 1, 1], [], []>} : vector<128x384xbf16>, vector<384x128xbf16>, vector<128x128xf32> -> vector<128x128xf32>
    %20 = arith.addf %17, %19 : vector<128x128xf32>
    %c0_13 = arith.constant 0 : index
    %c0_14 = arith.constant 0 : index
    %21 = vector.load %arg7[%c0_13, %c0_14] : memref<128x128xf32, #tpu.memory_space<vmem>>, vector<128x128xf32>
    tpu.vector_store %arg7[%c0_13, %c0_14], %20 {strides = array<i32>} : memref<128x128xf32, #tpu.memory_space<vmem>>, vector<128x128xf32>,
    %c0_i32_15 = arith.constant 0 : i32
    %22 = arith.cmpi eq, %arg1, %c0_i32_15 : i32
    %23 = arith.extui %22 : i1 to i32
    %c0_i32_16 = arith.constant 0 : i32
    %24 = arith.cmpi ne, %23, %c0_i32_16 : i32
    scf.if %24 {
      %c0_17 = arith.constant 0 : index
      %c0_18 = arith.constant 0 : index
      %25 = vector.load %arg7[%c0_17, %c0_18] : memref<128x128xf32, #tpu.memory_space<vmem>>, vector<128x128xf32>
      %c0_19 = arith.constant 0 : index
      %c0_20 = arith.constant 0 : index
      %26 = vector.load %arg6[%c0_19, %c0_20] : memref<128x128xf32, #tpu.memory_space<vmem>>, vector<128x128xf32>
      tpu.vector_store %arg6[%c0_19, %c0_20], %25 {strides = array<i32>} : memref<128x128xf32, #tpu.memory_space<vmem>>, vector<128x128xf32>,
    } else {
    }
    return
  }
  func.func @transform_0(%arg0: i32, %arg1: i32) -> (i32, i32) {
    %c0_i32 = arith.constant 0 : i32
    %c0_i32_0 = arith.constant 0 : i32
    return %arg0, %c0_i32 : i32, i32
  }
  func.func @transform_1(%arg0: i32, %arg1: i32) -> (i32, i32) {
    %c0_i32 = arith.constant 0 : i32
    %c0_i32_0 = arith.constant 0 : i32
    return %c0_i32, %arg1 : i32, i32
  }
  func.func @transform_2(%arg0: i32, %arg1: i32) -> (i32, i32) {
    %c0_i32 = arith.constant 0 : i32
    %c0_i32_0 = arith.constant 0 : i32
    return %c0_i32, %arg1 : i32, i32
  }
  func.func @transform_3(%arg0: i32, %arg1: i32) -> (i32, i32) {
    %c0_i32 = arith.constant 0 : i32
    %c0_i32_0 = arith.constant 0 : i32
    return %arg1, %c0_i32 : i32, i32
  }
  func.func @transform_4(%arg0: i32, %arg1: i32) -> (i32, i32) {
    %c0_i32 = arith.constant 0 : i32
    %c0_i32_0 = arith.constant 0 : i32
    return %arg0, %c0_i32 : i32, i32
  }
}

</mosaic_0001>

<llo_original>
// kernel: tpu_custom_call.1
$region0: #{tpu_custom_call.1}
  #allocation0 [shape = 'u32[]', space=smem, size = 0x4, offset = 0x4, fixed_abs, tag = 'smem constant byte address 0x4 - core index']
  #allocation1 [shape = 'u32[144,128]{1,0:T(1,128)}', space=vmem, size = 0x12000, scoped, tag = 'internal scratch']
  #allocation2 [shape = 'f32[128,128]{1,0:T(8,128)}', space=vmem, size = 0x10000, scoped, tag = 'scratch operand']
  %s0 = inlined_call_operand.hbm [shape: f32[128,128], index: 0, kind: input, shape index: {}]
  %s1 = inlined_call_operand.hbm [shape: bf16[128,384], index: 1, kind: input, shape index: {}]
  %s2 = inlined_call_operand.hbm [shape: bf16[128,384], index: 2, kind: input, shape index: {}]
  %s3 = inlined_call_operand.hbm [shape: bf16[384,128], index: 3, kind: input, shape index: {}]
  %s4 = inlined_call_operand.hbm [shape: f32[128,128], index: 4, kind: output, shape index: {}]
  %s5 = sld [smem:[#allocation0]]
  $region50: #{tpu_custom_call.1} parent=0
    _
  %s7 = ssub.s32 1, %s5
  %s8 = scalar_select 0, %s7, %s5
  $region1: #{tpu_custom_call.1} parent=0
    #allocation3 [shape = 'u8[65536]{0}', space=vmem, size = 0x10000, scoped, tag = 'input window, operand 0, single buffered']
    #allocation4 [shape = 's32[1]{0}', space=sflag, size = 0x4, scoped, tag = 'scoped memory for tpu_custom_call.1']
    #allocation5 [shape = 's32[1]{0}', space=sflag, size = 0x4, scoped, tag = 'scoped memory for tpu_custom_call.1']
    #allocation6 [shape = 'u8[98304]{0}', space=vmem, size = 0x18000, scoped, tag = 'input window, operand 1, single buffered']
    #allocation7 [shape = 's32[1]{0}', space=sflag, size = 0x4, scoped, tag = 'scoped memory for tpu_custom_call.1']
    #allocation8 [shape = 'u8[98304]{0}', space=vmem, size = 0x18000, scoped, tag = 'input window, operand 2, single buffered']
    #allocation9 [shape = 'u8[98304]{0}', space=vmem, size = 0x18000, scoped, tag = 'input window, operand 3, single buffered']
    #allocation10 [shape = 's32[1]{0}', space=sflag, size = 0x4, scoped, tag = 'scoped memory for tpu_custom_call.1']
    #allocation11 [shape = 'u8[65536]{0}', space=vmem, size = 0x10000, scoped, tag = 'output window, operand 0, single buffered']
    %9 = vsyncpa [#allocation4], 0
    %10 = vsyncpa [#allocation7], 0
    %11 = vsyncpa [#allocation10], 0
    %12 = vsyncpa [#allocation5], 0
    // Predicated region
    $region2: #{tpu_custom_call.1} parent=1 // pred_check
      _
    $region3: #{tpu_custom_call.1} parent=1 // pred_check_branch
      %14 = sbr.rel (0) target = $region5
    $region4: #{tpu_custom_call.1} parent=1 // pred_region
      %s16 = ssub.s32 2048, 2048
      %17 = vsyncadd [#allocation4], %s16
      %s18 = sshll.u32 [#allocation3], 4
      %s19 = int_to_ptr.vmem [resolvable:$true] %s18
      %24 = dma.hbm_to_vmem [thread:$0]  %s0, 2048, %s19, [#allocation4], 128, 128, 8
    $region5: #{tpu_custom_call.1} parent=1 // pred_fallthru
      _
    // Predicated region
    $region6: #{tpu_custom_call.1} parent=1 // pred_check
      _
    $region7: #{tpu_custom_call.1} parent=1 // pred_check_branch
      %26 = sbr.rel (0) target = $region9
    $region8: #{tpu_custom_call.1} parent=1 // pred_region
      %s28 = ssub.s32 3072, 3072
      %29 = vsyncadd [#allocation7], %s28
      %s30 = sshll.u32 [#allocation6], 4
      %s31 = int_to_ptr.vmem [resolvable:$true] %s30
      %36 = dma.hbm_to_vmem [thread:$0]  %s1, 3072, %s31, [#allocation7], 192, 192, 12
    $region9: #{tpu_custom_call.1} parent=1 // pred_fallthru
      _
    // Predicated region
    $region10: #{tpu_custom_call.1} parent=1 // pred_check
      _
    $region11: #{tpu_custom_call.1} parent=1 // pred_check_branch
      %38 = sbr.rel (0) target = $region13
    $region12: #{tpu_custom_call.1} parent=1 // pred_region
      %s40 = ssub.s32 3072, 3072
      %41 = vsyncadd [#allocation7], %s40
      %s42 = sshll.u32 [#allocation8], 4
      %s43 = int_to_ptr.vmem [resolvable:$true] %s42
      %48 = dma.hbm_to_vmem [thread:$0]  %s2, 3072, %s43, [#allocation7], 192, 192, 12
    $region13: #{tpu_custom_call.1} parent=1 // pred_fallthru
      _
    // Predicated region
    $region14: #{tpu_custom_call.1} parent=1 // pred_check
      _
    $region15: #{tpu_custom_call.1} parent=1 // pred_check_branch
      %50 = sbr.rel (0) target = $region17
    $region16: #{tpu_custom_call.1} parent=1 // pred_region
      %s52 = ssub.s32 3072, 3072
      %53 = vsyncadd [#allocation10], %s52
      %s54 = sshll.u32 [#allocation9], 4
      %s55 = int_to_ptr.vmem [resolvable:$true] %s54
      %60 = dma.hbm_to_vmem [thread:$0]  %s3, 3072, %s55, [#allocation10], 64, 64, 4
    $region17: #{tpu_custom_call.1} parent=1 // pred_fallthru
      _
    // Predicated region
    $region18: #{tpu_custom_call.1} parent=1 // pred_check
      _
    $region19: #{tpu_custom_call.1} parent=1 // pred_check_branch
      %62 = sbr.rel (0) target = $region21
    $region20: #{tpu_custom_call.1} parent=1 // pred_region
      %63 = dma.done [#allocation4], 2048
    $region21: #{tpu_custom_call.1} parent=1 // pred_fallthru
      _
    // Predicated region
    $region22: #{tpu_custom_call.1} parent=1 // pred_check
      _
    $region23: #{tpu_custom_call.1} parent=1 // pred_check_branch
      %65 = sbr.rel (0) target = $region25
    $region24: #{tpu_custom_call.1} parent=1 // pred_region
      %66 = dma.done [#allocation7], 3072
    $region25: #{tpu_custom_call.1} parent=1 // pred_fallthru
      _
    // Predicated region
    $region26: #{tpu_custom_call.1} parent=1 // pred_check
      _
    $region27: #{tpu_custom_call.1} parent=1 // pred_check_branch
      %68 = sbr.rel (0) target = $region29
    $region28: #{tpu_custom_call.1} parent=1 // pred_region
      %69 = dma.done [#allocation7], 3072
    $region29: #{tpu_custom_call.1} parent=1 // pred_fallthru
      _
    // Predicated region
    $region30: #{tpu_custom_call.1} parent=1 // pred_check
      _
    $region31: #{tpu_custom_call.1} parent=1 // pred_check_branch
      %71 = sbr.rel (0) target = $region33
    $region32: #{tpu_custom_call.1} parent=1 // pred_region
      %72 = dma.done [#allocation10], 3072
    $region33: #{tpu_custom_call.1} parent=1 // pred_fallthru
      _
    %p74 = scmp.eq.s32.totalorder 0, 0
    // Predicated region
    $region34: #{tpu_custom_call.1} parent=1 // pred_check
      %p75 = pneg %p74
    $region35: #{tpu_custom_call.1} parent=1 // pred_check_branch
      %77 = sbr.rel (%p75) target = $region37
    $region36: #{tpu_custom_call.1} parent=1 // pred_region
      %78 = vst [vmem:[#allocation2] sm:$0xff] 0.0
      %79 = vst [vmem:[#allocation2 + $0x8] sm:$0xff] 0.0
      %80 = vst [vmem:[#allocation2 + $0x10] sm:$0xff] 0.0
      %81 = vst [vmem:[#allocation2 + $0x18] sm:$0xff] 0.0
      %82 = vst [vmem:[#allocation2 + $0x20] sm:$0xff] 0.0
      %83 = vst [vmem:[#allocation2 + $0x28] sm:$0xff] 0.0
      %84 = vst [vmem:[#allocation2 + $0x30] sm:$0xff] 0.0
      %85 = vst [vmem:[#allocation2 + $0x38] sm:$0xff] 0.0
      %86 = vst [vmem:[#allocation2 + $0x40] sm:$0xff] 0.0
      %87 = vst [vmem:[#allocation2 + $0x48] sm:$0xff] 0.0
      %88 = vst [vmem:[#allocation2 + $0x50] sm:$0xff] 0.0
      %89 = vst [vmem:[#allocation2 + $0x58] sm:$0xff] 0.0
      %90 = vst [vmem:[#allocation2 + $0x60] sm:$0xff] 0.0
      %91 = vst [vmem:[#allocation2 + $0x68] sm:$0xff] 0.0
      %92 = vst [vmem:[#allocation2 + $0x70] sm:$0xff] 0.0
      %93 = vst [vmem:[#allocation2 + $0x78] sm:$0xff] 0.0
    $region37: #{tpu_custom_call.1} parent=1 // pred_fallthru
      _
    %v94 = vld [vmem:[#allocation3] sm:$0xff]
    %v95 = vld [vmem:[#allocation3 + $0x8] sm:$0xff]
    %v96 = vld [vmem:[#allocation3 + $0x10] sm:$0xff]
    %v97 = vld [vmem:[#allocation3 + $0x18] sm:$0xff]
    %v98 = vld [vmem:[#allocation3 + $0x20] sm:$0xff]
    %v99 = vld [vmem:[#allocation3 + $0x28] sm:$0xff]
    %v100 = vld [vmem:[#allocation3 + $0x30] sm:$0xff]
    %v101 = vld [vmem:[#allocation3 + $0x38] sm:$0xff]
    %v102 = vld [vmem:[#allocation3 + $0x40] sm:$0xff]
    %v103 = vld [vmem:[#allocation3 + $0x48] sm:$0xff]
    %v104 = vld [vmem:[#allocation3 + $0x50] sm:$0xff]
    %v105 = vld [vmem:[#allocation3 + $0x58] sm:$0xff]
    %v106 = vld [vmem:[#allocation3 + $0x60] sm:$0xff]
    %v107 = vld [vmem:[#allocation3 + $0x68] sm:$0xff]
    %v108 = vld [vmem:[#allocation3 + $0x70] sm:$0xff]
    %v109 = vld [vmem:[#allocation3 + $0x78] sm:$0xff]
    %v110 = vpack.c.bf16 %v95, %v94
    %v111 = vpack.c.bf16 %v97, %v96
    %v112 = vpack.c.bf16 %v99, %v98
    %v113 = vpack.c.bf16 %v101, %v100
    %v114 = vpack.c.bf16 %v103, %v102
    %v115 = vpack.c.bf16 %v105, %v104
    %v116 = vpack.c.bf16 %v107, %v106
    %v117 = vpack.c.bf16 %v109, %v108
    %v118 = vld [vmem:[#allocation6] sm:$0xff]
    %v119 = vld [vmem:[#allocation6 + $0x8] sm:$0xf]
    %v120 = vld [vmem:[#allocation6 + $0xc] sm:$0xff]
    %v121 = vld [vmem:[#allocation6 + $0x14] sm:$0xf]
    %v122 = vld [vmem:[#allocation6 + $0x18] sm:$0xff]
    %v123 = vld [vmem:[#allocation6 + $0x20] sm:$0xf]
    %v124 = vld [vmem:[#allocation6 + $0x24] sm:$0xff]
    %v125 = vld [vmem:[#allocation6 + $0x2c] sm:$0xf]
    %v126 = vld [vmem:[#allocation6 + $0x30] sm:$0xff]
    %v127 = vld [vmem:[#allocation6 + $0x38] sm:$0xf]
    %v128 = vld [vmem:[#allocation6 + $0x3c] sm:$0xff]
    %v129 = vld [vmem:[#allocation6 + $0x44] sm:$0xf]
    %v130 = vld [vmem:[#allocation6 + $0x48] sm:$0xff]
    %v131 = vld [vmem:[#allocation6 + $0x50] sm:$0xf]
    %v132 = vld [vmem:[#allocation6 + $0x54] sm:$0xff]
    %v133 = vld [vmem:[#allocation6 + $0x5c] sm:$0xf]
    %v134 = vld [vmem:[#allocation6 + $0x60] sm:$0xff]
    %v135 = vld [vmem:[#allocation6 + $0x68] sm:$0xf]
    %v136 = vld [vmem:[#allocation6 + $0x6c] sm:$0xff]
    %v137 = vld [vmem:[#allocation6 + $0x74] sm:$0xf]
    %v138 = vld [vmem:[#allocation6 + $0x78] sm:$0xff]
    %v139 = vld [vmem:[#allocation6 + $0x80] sm:$0xf]
    %v140 = vld [vmem:[#allocation6 + $0x84] sm:$0xff]
    %v141 = vld [vmem:[#allocation6 + $0x8c] sm:$0xf]
    %v142 = vld [vmem:[#allocation6 + $0x90] sm:$0xff]
    %v143 = vld [vmem:[#allocation6 + $0x98] sm:$0xf]
    %v144 = vld [vmem:[#allocation6 + $0x9c] sm:$0xff]
    %v145 = vld [vmem:[#allocation6 + $0xa4] sm:$0xf]
    %v146 = vld [vmem:[#allocation6 + $0xa8] sm:$0xff]
    %v147 = vld [vmem:[#allocation6 + $0xb0] sm:$0xf]
    %v148 = vld [vmem:[#allocation6 + $0xb4] sm:$0xff]
    %v149 = vld [vmem:[#allocation6 + $0xbc] sm:$0xf]
    %v182 = vunpack.c.l.b16 %v118
    %v183 = vunpack.c.h.b16 %v118
    %v184 = vunpack.c.l.b16 %v119
    %v185 = vunpack.c.l.b16 %v120
    %v186 = vunpack.c.h.b16 %v120
    %v187 = vunpack.c.l.b16 %v121
    %v188 = vunpack.c.l.b16 %v122
    %v189 = vunpack.c.h.b16 %v122
    %v190 = vunpack.c.l.b16 %v123
    %v191 = vunpack.c.l.b16 %v124
    %v192 = vunpack.c.h.b16 %v124
    %v193 = vunpack.c.l.b16 %v125
    %v194 = vunpack.c.l.b16 %v126
    %v195 = vunpack.c.h.b16 %v126
    %v196 = vunpack.c.l.b16 %v127
    %v197 = vunpack.c.l.b16 %v128
    %v198 = vunpack.c.h.b16 %v128
    %v199 = vunpack.c.l.b16 %v129
    %v200 = vunpack.c.l.b16 %v130
    %v201 = vunpack.c.h.b16 %v130
    %v202 = vunpack.c.l.b16 %v131
    %v203 = vunpack.c.l.b16 %v132
    %v204 = vunpack.c.h.b16 %v132
    %v205 = vunpack.c.l.b16 %v133
    %v206 = vunpack.c.l.b16 %v134
    %v207 = vunpack.c.h.b16 %v134
    %v208 = vunpack.c.l.b16 %v135
    %v209 = vunpack.c.l.b16 %v136
    %v210 = vunpack.c.h.b16 %v136
    %v211 = vunpack.c.l.b16 %v137
    %v212 = vunpack.c.l.b16 %v138
    %v213 = vunpack.c.h.b16 %v138
    %v214 = vunpack.c.l.b16 %v139
    %v215 = vunpack.c.l.b16 %v140
    %v216 = vunpack.c.h.b16 %v140
    %v217 = vunpack.c.l.b16 %v141
    %v218 = vunpack.c.l.b16 %v142
    %v219 = vunpack.c.h.b16 %v142
    %v220 = vunpack.c.l.b16 %v143
    %v221 = vunpack.c.l.b16 %v144
    %v222 = vunpack.c.h.b16 %v144
    %v223 = vunpack.c.l.b16 %v145
    %v224 = vunpack.c.l.b16 %v146
    %v225 = vunpack.c.h.b16 %v146
    %v226 = vunpack.c.l.b16 %v147
    %v227 = vunpack.c.l.b16 %v148
    %v228 = vunpack.c.h.b16 %v148
    %v229 = vunpack.c.l.b16 %v149
    %v230 = vpack.c.b16 %v185, %v182
    %v231 = vpack.c.b16 %v186, %v183
    %v232 = vpack.c.b16 %v187, %v184
    %v233 = vpack.c.b16 %v191, %v188
    %v234 = vpack.c.b16 %v192, %v189
    %v235 = vpack.c.b16 %v193, %v190
    %v236 = vpack.c.b16 %v197, %v194
    %v237 = vpack.c.b16 %v198, %v195
    %v238 = vpack.c.b16 %v199, %v196
    %v239 = vpack.c.b16 %v203, %v200
    %v240 = vpack.c.b16 %v204, %v201
    %v241 = vpack.c.b16 %v205, %v202
    %v242 = vpack.c.b16 %v209, %v206
    %v243 = vpack.c.b16 %v210, %v207
    %v244 = vpack.c.b16 %v211, %v208
    %v245 = vpack.c.b16 %v215, %v212
    %v246 = vpack.c.b16 %v216, %v213
    %v247 = vpack.c.b16 %v217, %v214
    %v248 = vpack.c.b16 %v221, %v218
    %v249 = vpack.c.b16 %v222, %v219
    %v250 = vpack.c.b16 %v223, %v220
    %v251 = vpack.c.b16 %v227, %v224
    %v252 = vpack.c.b16 %v228, %v225
    %v253 = vpack.c.b16 %v229, %v226
    %278 = vmatprep.subr.bf16.mxu0 %v252
    %279 = vmatpush1.bf16.msra.mxu0 %v251
    %280 = vmatprep.subr.bf16.mxu0 %v249
    %281 = vmatpush1.bf16.msra.mxu0 %v248
    %282 = vmatprep.subr.bf16.mxu0 %v246
    %283 = vmatpush1.bf16.msra.mxu0 %v245
    %284 = vmatprep.subr.bf16.mxu0 %v243
    %285 = vmatpush1.bf16.msra.mxu0 %v242
    %286 = vmatprep.subr.bf16.mxu0 %v240
    %287 = vmatpush1.bf16.msra.mxu0 %v239
    %288 = vmatprep.subr.bf16.mxu0 %v237
    %289 = vmatpush1.bf16.msra.mxu0 %v236
    %290 = vmatprep.subr.bf16.mxu0 %v234
    %291 = vmatpush1.bf16.msra.mxu0 %v233
    %292 = vmatprep.subr.bf16.mxu0 %v231
    %293 = vmatpush1.bf16.msra.mxu0 %v230
    %294 = vmatprep.subr.bf16.mxu0 0
    %295 = vmatpush2.bf16.msra.mxu0 0
    %296 = vmatprep.subr.bf16.mxu0 0
    %297 = vmatpush2.bf16.msra.mxu0 0
    %298 = vmatprep.subr.bf16.mxu0 0
    %299 = vmatpush2.bf16.msra.mxu0 0
    %300 = vmatprep.subr.bf16.mxu0 0
    %301 = vmatpush2.bf16.msra.mxu0 0
    %302 = vmatprep.subr.bf16.mxu0 0
    %303 = vmatpush2.bf16.msra.mxu0 0
    %304 = vmatprep.subr.bf16.mxu0 0
    %305 = vmatpush2.bf16.msra.mxu0 0
    %306 = vmatprep.subr.bf16.mxu0 0
    %307 = vmatpush2.bf16.msra.mxu0 0
    %308 = vmatprep.subr.bf16.mxu0 0
    %309 = vmatpush2.bf16.msra.mxu0 0
    %310 = vmatprep.mubr.bf16.mxu0 0
    %311 = vmatmul.mubr.bf16.gmra.mxu0 %v110
    %v312 = vpop.f32.mrf.mxu0
    %v313 = vadd.f32 0.0, %v312
    %v314 = vpop.f32.mrf.mxu0
    %v315 = vadd.f32 0.0, %v314
    %v316 = vpop.f32.mrf.mxu0
    %v317 = vadd.f32 0.0, %v316
    %v318 = vpop.f32.mrf.mxu0
    %v319 = vadd.f32 0.0, %v318
    %320 = vmatprep.mubr.bf16.mxu0 0
    %321 = vmatmul.mubr.bf16.gmra.mxu0 %v111
    %v322 = vpop.f32.mrf.mxu0
    %v323 = vadd.f32 0.0, %v322
    %v324 = vpop.f32.mrf.mxu0
    %v325 = vadd.f32 0.0, %v324
    %v326 = vpop.f32.mrf.mxu0
    %v327 = vadd.f32 0.0, %v326
    %v328 = vpop.f32.mrf.mxu0
    %v329 = vadd.f32 0.0, %v328
    %330 = vmatprep.mubr.bf16.mxu0 0
    %331 = vmatmul.mubr.bf16.gmra.mxu0 %v112
    %v332 = vpop.f32.mrf.mxu0
    %v333 = vadd.f32 0.0, %v332
    %v334 = vpop.f32.mrf.mxu0
    %v335 = vadd.f32 0.0, %v334
    %v336 = vpop.f32.mrf.mxu0
    %v337 = vadd.f32 0.0, %v336
    %v338 = vpop.f32.mrf.mxu0
    %v339 = vadd.f32 0.0, %v338
    %340 = vmatprep.mubr.bf16.mxu0 0
    %341 = vmatmul.mubr.bf16.gmra.mxu0 %v113
    %v342 = vpop.f32.mrf.mxu0
    %v343 = vadd.f32 0.0, %v342
    %v344 = vpop.f32.mrf.mxu0
    %v345 = vadd.f32 0.0, %v344
    %v346 = vpop.f32.mrf.mxu0
    %v347 = vadd.f32 0.0, %v346
    %v348 = vpop.f32.mrf.mxu0
    %v349 = vadd.f32 0.0, %v348
    %350 = vmatprep.mubr.bf16.mxu0 0
    %351 = vmatmul.mubr.bf16.gmra.mxu0 %v114
    %v352 = vpop.f32.mrf.mxu0
    %v353 = vadd.f32 0.0, %v352
    %v354 = vpop.f32.mrf.mxu0
    %v355 = vadd.f32 0.0, %v354
    %v356 = vpop.f32.mrf.mxu0
    %v357 = vadd.f32 0.0, %v356
    %v358 = vpop.f32.mrf.mxu0
    %v359 = vadd.f32 0.0, %v358
    %360 = vmatprep.mubr.bf16.mxu0 0
    %361 = vmatmul.mubr.bf16.gmra.mxu0 %v115
    %v362 = vpop.f32.mrf.mxu0
    %v363 = vadd.f32 0.0, %v362
    %v364 = vpop.f32.mrf.mxu0
    %v365 = vadd.f32 0.0, %v364
    %v366 = vpop.f32.mrf.mxu0
    %v367 = vadd.f32 0.0, %v366
    %v368 = vpop.f32.mrf.mxu0
    %v369 = vadd.f32 0.0, %v368
    %370 = vmatprep.mubr.bf16.mxu0 0
    %371 = vmatmul.mubr.bf16.gmra.mxu0 %v116
    %v372 = vpop.f32.mrf.mxu0
    %v373 = vadd.f32 0.0, %v372
    %v374 = vpop.f32.mrf.mxu0
    %v375 = vadd.f32 0.0, %v374
    %v376 = vpop.f32.mrf.mxu0
    %v377 = vadd.f32 0.0, %v376
    %v378 = vpop.f32.mrf.mxu0
    %v379 = vadd.f32 0.0, %v378
    %380 = vmatprep.mubr.bf16.mxu0 0
    %381 = vmatmul.mubr.bf16.gmra.mxu0 %v117
    %v382 = vpop.f32.mrf.mxu0
    %v383 = vadd.f32 0.0, %v382
    %v384 = vpop.f32.mrf.mxu0
    %v385 = vadd.f32 0.0, %v384
    %v386 = vpop.f32.mrf.mxu0
    %v387 = vadd.f32 0.0, %v386
    %v388 = vpop.f32.mrf.mxu0
    %v389 = vadd.f32 0.0, %v388
    %390 = vdwg.mxu0
    %391 = vmatprep.subr.bf16.mxu0 0
    %392 = vmatpush1.bf16.msra.mxu0 %v253
    %393 = vmatprep.subr.bf16.mxu0 0
    %394 = vmatpush1.bf16.msra.mxu0 %v250
    %395 = vmatprep.subr.bf16.mxu0 0
    %396 = vmatpush1.bf16.msra.mxu0 %v247
    %397 = vmatprep.subr.bf16.mxu0 0
    %398 = vmatpush1.bf16.msra.mxu0 %v244
    %399 = vmatprep.subr.bf16.mxu0 0
    %400 = vmatpush1.bf16.msra.mxu0 %v241
    %401 = vmatprep.subr.bf16.mxu0 0
    %402 = vmatpush1.bf16.msra.mxu0 %v238
    %403 = vmatprep.subr.bf16.mxu0 0
    %404 = vmatpush1.bf16.msra.mxu0 %v235
    %405 = vmatprep.subr.bf16.mxu0 0
    %406 = vmatpush1.bf16.msra.mxu0 %v232
    %407 = vmatprep.subr.bf16.mxu0 0
    %408 = vmatpush2.bf16.msra.mxu0 0
    %409 = vmatprep.subr.bf16.mxu0 0
    %410 = vmatpush2.bf16.msra.mxu0 0
    %411 = vmatprep.subr.bf16.mxu0 0
    %412 = vmatpush2.bf16.msra.mxu0 0
    %413 = vmatprep.subr.bf16.mxu0 0
    %414 = vmatpush2.bf16.msra.mxu0 0
    %415 = vmatprep.subr.bf16.mxu0 0
    %416 = vmatpush2.bf16.msra.mxu0 0
    %417 = vmatprep.subr.bf16.mxu0 0
    %418 = vmatpush2.bf16.msra.mxu0 0
    %419 = vmatprep.subr.bf16.mxu0 0
    %420 = vmatpush2.bf16.msra.mxu0 0
    %421 = vmatprep.subr.bf16.mxu0 0
    %422 = vmatpush2.bf16.msra.mxu0 0
    %423 = vmatprep.mubr.bf16.mxu0 0
    %424 = vmatmul.mubr.bf16.gmra.mxu0 %v110
    %v425 = vpop.f32.mrf.mxu0
    %v426 = vadd.f32 0.0, %v425
    %v427 = vpop.f32.mrf.mxu0
    %v428 = vpop.f32.mrf.mxu0
    %v429 = vadd.f32 0.0, %v428
    %v430 = vpop.f32.mrf.mxu0
    %431 = vmatprep.mubr.bf16.mxu0 0
    %432 = vmatmul.mubr.bf16.gmra.mxu0 %v111
    %v433 = vpop.f32.mrf.mxu0
    %v434 = vadd.f32 0.0, %v433
    %v435 = vpop.f32.mrf.mxu0
    %v436 = vpop.f32.mrf.mxu0
    %v437 = vadd.f32 0.0, %v436
    %v438 = vpop.f32.mrf.mxu0
    %439 = vmatprep.mubr.bf16.mxu0 0
    %440 = vmatmul.mubr.bf16.gmra.mxu0 %v112
    %v441 = vpop.f32.mrf.mxu0
    %v442 = vadd.f32 0.0, %v441
    %v443 = vpop.f32.mrf.mxu0
    %v444 = vpop.f32.mrf.mxu0
    %v445 = vadd.f32 0.0, %v444
    %v446 = vpop.f32.mrf.mxu0
    %447 = vmatprep.mubr.bf16.mxu0 0
    %448 = vmatmul.mubr.bf16.gmra.mxu0 %v113
    %v449 = vpop.f32.mrf.mxu0
    %v450 = vadd.f32 0.0, %v449
    %v451 = vpop.f32.mrf.mxu0
    %v452 = vpop.f32.mrf.mxu0
    %v453 = vadd.f32 0.0, %v452
    %v454 = vpop.f32.mrf.mxu0
    %455 = vmatprep.mubr.bf16.mxu0 0
    %456 = vmatmul.mubr.bf16.gmra.mxu0 %v114
    %v457 = vpop.f32.mrf.mxu0
    %v458 = vadd.f32 0.0, %v457
    %v459 = vpop.f32.mrf.mxu0
    %v460 = vpop.f32.mrf.mxu0
    %v461 = vadd.f32 0.0, %v460
    %v462 = vpop.f32.mrf.mxu0
    %463 = vmatprep.mubr.bf16.mxu0 0
    %464 = vmatmul.mubr.bf16.gmra.mxu0 %v115
    %v465 = vpop.f32.mrf.mxu0
    %v466 = vadd.f32 0.0, %v465
    %v467 = vpop.f32.mrf.mxu0
    %v468 = vpop.f32.mrf.mxu0
    %v469 = vadd.f32 0.0, %v468
    %v470 = vpop.f32.mrf.mxu0
    %471 = vmatprep.mubr.bf16.mxu0 0
    %472 = vmatmul.mubr.bf16.gmra.mxu0 %v116
    %v473 = vpop.f32.mrf.mxu0
    %v474 = vadd.f32 0.0, %v473
    %v475 = vpop.f32.mrf.mxu0
    %v476 = vpop.f32.mrf.mxu0
    %v477 = vadd.f32 0.0, %v476
    %v478 = vpop.f32.mrf.mxu0
    %479 = vmatprep.mubr.bf16.mxu0 0
    %480 = vmatmul.mubr.bf16.gmra.mxu0 %v117
    %v481 = vpop.f32.mrf.mxu0
    %v482 = vadd.f32 0.0, %v481
    %v483 = vpop.f32.mrf.mxu0
    %v484 = vpop.f32.mrf.mxu0
    %v485 = vadd.f32 0.0, %v484
    %v486 = vpop.f32.mrf.mxu0
    %487 = vdwg.mxu0
    %v488 = vxor.u32 %v313, 2147483648
    %v489 = vxor.u32 %v315, 2147483648
    %v490 = vxor.u32 %v426, 2147483648
    %v491 = vxor.u32 %v317, 2147483648
    %v492 = vxor.u32 %v319, 2147483648
    %v493 = vxor.u32 %v429, 2147483648
    %v494 = vxor.u32 %v323, 2147483648
    %v495 = vxor.u32 %v325, 2147483648
    %v496 = vxor.u32 %v434, 2147483648
    %v497 = vxor.u32 %v327, 2147483648
    %v498 = vxor.u32 %v329, 2147483648
    %v499 = vxor.u32 %v437, 2147483648
    %v500 = vxor.u32 %v333, 2147483648
    %v501 = vxor.u32 %v335, 2147483648
    %v502 = vxor.u32 %v442, 2147483648
    %v503 = vxor.u32 %v337, 2147483648
    %v504 = vxor.u32 %v339, 2147483648
    %v505 = vxor.u32 %v445, 2147483648
    %v506 = vxor.u32 %v343, 2147483648
    %v507 = vxor.u32 %v345, 2147483648
    %v508 = vxor.u32 %v450, 2147483648
    %v509 = vxor.u32 %v347, 2147483648
    %v510 = vxor.u32 %v349, 2147483648
    %v511 = vxor.u32 %v453, 2147483648
    %v512 = vxor.u32 %v353, 2147483648
    %v513 = vxor.u32 %v355, 2147483648
    %v514 = vxor.u32 %v458, 2147483648
    %v515 = vxor.u32 %v357, 2147483648
    %v516 = vxor.u32 %v359, 2147483648
    %v517 = vxor.u32 %v461, 2147483648
    %v518 = vxor.u32 %v363, 2147483648
    %v519 = vxor.u32 %v365, 2147483648
    %v520 = vxor.u32 %v466, 2147483648
    %v521 = vxor.u32 %v367, 2147483648
    %v522 = vxor.u32 %v369, 2147483648
    %v523 = vxor.u32 %v469, 2147483648
    %v524 = vxor.u32 %v373, 2147483648
    %v525 = vxor.u32 %v375, 2147483648
    %v526 = vxor.u32 %v474, 2147483648
    %v527 = vxor.u32 %v377, 2147483648
    %v528 = vxor.u32 %v379, 2147483648
    %v529 = vxor.u32 %v477, 2147483648
    %v530 = vxor.u32 %v383, 2147483648
    %v531 = vxor.u32 %v385, 2147483648
    %v532 = vxor.u32 %v482, 2147483648
    %v533 = vxor.u32 %v387, 2147483648
    %v534 = vxor.u32 %v389, 2147483648
    %v535 = vxor.u32 %v485, 2147483648
    %v536 = vmul.f32 %v488, 1.442695
    %v537 = vpow.pop %v536
    %v538 = vmul.f32 %v489, 1.442695
    %v539 = vpow.pop %v538
    %v540 = vmul.f32 %v490, 1.442695
    %v541 = vpow.pop %v540
    %v542 = vmul.f32 %v491, 1.442695
    %v543 = vpow.pop %v542
    %v544 = vmul.f32 %v492, 1.442695
    %v545 = vpow.pop %v544
    %v546 = vmul.f32 %v493, 1.442695
    %v547 = vpow.pop %v546
    %v548 = vmul.f32 %v494, 1.442695
    %v549 = vpow.pop %v548
    %v550 = vmul.f32 %v495, 1.442695
    %v551 = vpow.pop %v550
    %v552 = vmul.f32 %v496, 1.442695
    %v553 = vpow.pop %v552
    %v554 = vmul.f32 %v497, 1.442695
    %v555 = vpow.pop %v554
    %v556 = vmul.f32 %v498, 1.442695
    %v557 = vpow.pop %v556
    %v558 = vmul.f32 %v499, 1.442695
    %v559 = vpow.pop %v558
    %v560 = vmul.f32 %v500, 1.442695
    %v561 = vpow.pop %v560
    %v562 = vmul.f32 %v501, 1.442695
    %v563 = vpow.pop %v562
    %v564 = vmul.f32 %v502, 1.442695
    %v565 = vpow.pop %v564
    %v566 = vmul.f32 %v503, 1.442695
    %v567 = vpow.pop %v566
    %v568 = vmul.f32 %v504, 1.442695
    %v569 = vpow.pop %v568
    %v570 = vmul.f32 %v505, 1.442695
    %v571 = vpow.pop %v570
    %v572 = vmul.f32 %v506, 1.442695
    %v573 = vpow.pop %v572
    %v574 = vmul.f32 %v507, 1.442695
    %v575 = vpow.pop %v574
    %v576 = vmul.f32 %v508, 1.442695
    %v577 = vpow.pop %v576
    %v578 = vmul.f32 %v509, 1.442695
    %v579 = vpow.pop %v578
    %v580 = vmul.f32 %v510, 1.442695
    %v581 = vpow.pop %v580
    %v582 = vmul.f32 %v511, 1.442695
    %v583 = vpow.pop %v582
    %v584 = vmul.f32 %v512, 1.442695
    %v585 = vpow.pop %v584
    %v586 = vmul.f32 %v513, 1.442695
    %v587 = vpow.pop %v586
    %v588 = vmul.f32 %v514, 1.442695
    %v589 = vpow.pop %v588
    %v590 = vmul.f32 %v515, 1.442695
    %v591 = vpow.pop %v590
    %v592 = vmul.f32 %v516, 1.442695
    %v593 = vpow.pop %v592
    %v594 = vmul.f32 %v517, 1.442695
    %v595 = vpow.pop %v594
    %v596 = vmul.f32 %v518, 1.442695
    %v597 = vpow.pop %v596
    %v598 = vmul.f32 %v519, 1.442695
    %v599 = vpow.pop %v598
    %v600 = vmul.f32 %v520, 1.442695
    %v601 = vpow.pop %v600
    %v602 = vmul.f32 %v521, 1.442695
    %v603 = vpow.pop %v602
    %v604 = vmul.f32 %v522, 1.442695
    %v605 = vpow.pop %v604
    %v606 = vmul.f32 %v523, 1.442695
    %v607 = vpow.pop %v606
    %v608 = vmul.f32 %v524, 1.442695
    %v609 = vpow.pop %v608
    %v610 = vmul.f32 %v525, 1.442695
    %v611 = vpow.pop %v610
    %v612 = vmul.f32 %v526, 1.442695
    %v613 = vpow.pop %v612
    %v614 = vmul.f32 %v527, 1.442695
    %v615 = vpow.pop %v614
    %v616 = vmul.f32 %v528, 1.442695
    %v617 = vpow.pop %v616
    %v618 = vmul.f32 %v529, 1.442695
    %v619 = vpow.pop %v618
    %v620 = vmul.f32 %v530, 1.442695
    %v621 = vpow.pop %v620
    %v622 = vmul.f32 %v531, 1.442695
    %v623 = vpow.pop %v622
    %v624 = vmul.f32 %v532, 1.442695
    %v625 = vpow.pop %v624
    %v626 = vmul.f32 %v533, 1.442695
    %v627 = vpow.pop %v626
    %v628 = vmul.f32 %v534, 1.442695
    %v629 = vpow.pop %v628
    %v630 = vmul.f32 %v535, 1.442695
    %v631 = vpow.pop %v630
    %v632 = vadd.f32 %v537, 1.0
    %v633 = vadd.f32 %v539, 1.0
    %v634 = vadd.f32 %v541, 1.0
    %v635 = vadd.f32 %v543, 1.0
    %v636 = vadd.f32 %v545, 1.0
    %v637 = vadd.f32 %v547, 1.0
    %v638 = vadd.f32 %v549, 1.0
    %v639 = vadd.f32 %v551, 1.0
    %v640 = vadd.f32 %v553, 1.0
    %v641 = vadd.f32 %v555, 1.0
    %v642 = vadd.f32 %v557, 1.0
    %v643 = vadd.f32 %v559, 1.0
    %v644 = vadd.f32 %v561, 1.0
    %v645 = vadd.f32 %v563, 1.0
    %v646 = vadd.f32 %v565, 1.0
    %v647 = vadd.f32 %v567, 1.0
    %v648 = vadd.f32 %v569, 1.0
    %v649 = vadd.f32 %v571, 1.0
    %v650 = vadd.f32 %v573, 1.0
    %v651 = vadd.f32 %v575, 1.0
    %v652 = vadd.f32 %v577, 1.0
    %v653 = vadd.f32 %v579, 1.0
    %v654 = vadd.f32 %v581, 1.0
    %v655 = vadd.f32 %v583, 1.0
    %v656 = vadd.f32 %v585, 1.0
    %v657 = vadd.f32 %v587, 1.0
    %v658 = vadd.f32 %v589, 1.0
    %v659 = vadd.f32 %v591, 1.0
    %v660 = vadd.f32 %v593, 1.0
    %v661 = vadd.f32 %v595, 1.0
    %v662 = vadd.f32 %v597, 1.0
    %v663 = vadd.f32 %v599, 1.0
    %v664 = vadd.f32 %v601, 1.0
    %v665 = vadd.f32 %v603, 1.0
    %v666 = vadd.f32 %v605, 1.0
    %v667 = vadd.f32 %v607, 1.0
    %v668 = vadd.f32 %v609, 1.0
    %v669 = vadd.f32 %v611, 1.0
    %v670 = vadd.f32 %v613, 1.0
    %v671 = vadd.f32 %v615, 1.0
    %v672 = vadd.f32 %v617, 1.0
    %v673 = vadd.f32 %v619, 1.0
    %v674 = vadd.f32 %v621, 1.0
    %v675 = vadd.f32 %v623, 1.0
    %v676 = vadd.f32 %v625, 1.0
    %v677 = vadd.f32 %v627, 1.0
    %v678 = vadd.f32 %v629, 1.0
    %v679 = vadd.f32 %v631, 1.0
    %v680 = vrcp.pop %v632
    %v681 = vmul.f32 1.0, %v680
    %v682 = vrcp.pop %v633
    %v683 = vmul.f32 1.0, %v682
    %v684 = vrcp.pop %v634
    %v685 = vmul.f32 1.0, %v684
    %v686 = vrcp.pop %v635
    %v687 = vmul.f32 1.0, %v686
    %v688 = vrcp.pop %v636
    %v689 = vmul.f32 1.0, %v688
    %v690 = vrcp.pop %v637
    %v691 = vmul.f32 1.0, %v690
    %v692 = vrcp.pop %v638
    %v693 = vmul.f32 1.0, %v692
    %v694 = vrcp.pop %v639
    %v695 = vmul.f32 1.0, %v694
    %v696 = vrcp.pop %v640
    %v697 = vmul.f32 1.0, %v696
    %v698 = vrcp.pop %v641
    %v699 = vmul.f32 1.0, %v698
    %v700 = vrcp.pop %v642
    %v701 = vmul.f32 1.0, %v700
    %v702 = vrcp.pop %v643
    %v703 = vmul.f32 1.0, %v702
    %v704 = vrcp.pop %v644
    %v705 = vmul.f32 1.0, %v704
    %v706 = vrcp.pop %v645
    %v707 = vmul.f32 1.0, %v706
    %v708 = vrcp.pop %v646
    %v709 = vmul.f32 1.0, %v708
    %v710 = vrcp.pop %v647
    %v711 = vmul.f32 1.0, %v710
    %v712 = vrcp.pop %v648
    %v713 = vmul.f32 1.0, %v712
    %v714 = vrcp.pop %v649
    %v715 = vmul.f32 1.0, %v714
    %v716 = vrcp.pop %v650
    %v717 = vmul.f32 1.0, %v716
    %v718 = vrcp.pop %v651
    %v719 = vmul.f32 1.0, %v718
    %v720 = vrcp.pop %v652
    %v721 = vmul.f32 1.0, %v720
    %v722 = vrcp.pop %v653
    %v723 = vmul.f32 1.0, %v722
    %v724 = vrcp.pop %v654
    %v725 = vmul.f32 1.0, %v724
    %v726 = vrcp.pop %v655
    %v727 = vmul.f32 1.0, %v726
    %v728 = vrcp.pop %v656
    %v729 = vmul.f32 1.0, %v728
    %v730 = vrcp.pop %v657
    %v731 = vmul.f32 1.0, %v730
    %v732 = vrcp.pop %v658
    %v733 = vmul.f32 1.0, %v732
    %v734 = vrcp.pop %v659
    %v735 = vmul.f32 1.0, %v734
    %v736 = vrcp.pop %v660
    %v737 = vmul.f32 1.0, %v736
    %v738 = vrcp.pop %v661
    %v739 = vmul.f32 1.0, %v738
    %v740 = vrcp.pop %v662
    %v741 = vmul.f32 1.0, %v740
    %v742 = vrcp.pop %v663
    %v743 = vmul.f32 1.0, %v742
    %v744 = vrcp.pop %v664
    %v745 = vmul.f32 1.0, %v744
    %v746 = vrcp.pop %v665
    %v747 = vmul.f32 1.0, %v746
    %v748 = vrcp.pop %v666
    %v749 = vmul.f32 1.0, %v748
    %v750 = vrcp.pop %v667
    %v751 = vmul.f32 1.0, %v750
    %v752 = vrcp.pop %v668
    %v753 = vmul.f32 1.0, %v752
    %v754 = vrcp.pop %v669
    %v755 = vmul.f32 1.0, %v754
    %v756 = vrcp.pop %v670
    %v757 = vmul.f32 1.0, %v756
    %v758 = vrcp.pop %v671
    %v759 = vmul.f32 1.0, %v758
    %v760 = vrcp.pop %v672
    %v761 = vmul.f32 1.0, %v760
    %v762 = vrcp.pop %v673
    %v763 = vmul.f32 1.0, %v762
    %v764 = vrcp.pop %v674
    %v765 = vmul.f32 1.0, %v764
    %v766 = vrcp.pop %v675
    %v767 = vmul.f32 1.0, %v766
    %v768 = vrcp.pop %v676
    %v769 = vmul.f32 1.0, %v768
    %v770 = vrcp.pop %v677
    %v771 = vmul.f32 1.0, %v770
    %v772 = vrcp.pop %v678
    %v773 = vmul.f32 1.0, %v772
    %v774 = vrcp.pop %v679
    %v775 = vmul.f32 1.0, %v774
    %v776 = vmul.f32 %v313, %v681
    %v777 = vmul.f32 %v315, %v683
    %v778 = vmul.f32 %v426, %v685
    %v779 = vmul.f32 %v317, %v687
    %v780 = vmul.f32 %v319, %v689
    %v781 = vmul.f32 %v429, %v691
    %v782 = vmul.f32 %v323, %v693
    %v783 = vmul.f32 %v325, %v695
    %v784 = vmul.f32 %v434, %v697
    %v785 = vmul.f32 %v327, %v699
    %v786 = vmul.f32 %v329, %v701
    %v787 = vmul.f32 %v437, %v703
    %v788 = vmul.f32 %v333, %v705
    %v789 = vmul.f32 %v335, %v707
    %v790 = vmul.f32 %v442, %v709
    %v791 = vmul.f32 %v337, %v711
    %v792 = vmul.f32 %v339, %v713
    %v793 = vmul.f32 %v445, %v715
    %v794 = vmul.f32 %v343, %v717
    %v795 = vmul.f32 %v345, %v719
    %v796 = vmul.f32 %v450, %v721
    %v797 = vmul.f32 %v347, %v723
    %v798 = vmul.f32 %v349, %v725
    %v799 = vmul.f32 %v453, %v727
    %v800 = vmul.f32 %v353, %v729
    %v801 = vmul.f32 %v355, %v731
    %v802 = vmul.f32 %v458, %v733
    %v803 = vmul.f32 %v357, %v735
    %v804 = vmul.f32 %v359, %v737
    %v805 = vmul.f32 %v461, %v739
    %v806 = vmul.f32 %v363, %v741
    %v807 = vmul.f32 %v365, %v743
    %v808 = vmul.f32 %v466, %v745
    %v809 = vmul.f32 %v367, %v747
    %v810 = vmul.f32 %v369, %v749
    %v811 = vmul.f32 %v469, %v751
    %v812 = vmul.f32 %v373, %v753
    %v813 = vmul.f32 %v375, %v755
    %v814 = vmul.f32 %v474, %v757
    %v815 = vmul.f32 %v377, %v759
    %v816 = vmul.f32 %v379, %v761
    %v817 = vmul.f32 %v477, %v763
    %v818 = vmul.f32 %v383, %v765
    %v819 = vmul.f32 %v385, %v767
    %v820 = vmul.f32 %v482, %v769
    %v821 = vmul.f32 %v387, %v771
    %v822 = vmul.f32 %v389, %v773
    %v823 = vmul.f32 %v485, %v775
    %v824 = vld [vmem:[#allocation8] sm:$0xff]
    %v825 = vld [vmem:[#allocation8 + $0x8] sm:$0xf]
    %v826 = vld [vmem:[#allocation8 + $0xc] sm:$0xff]
    %v827 = vld [vmem:[#allocation8 + $0x14] sm:$0xf]
    %v828 = vld [vmem:[#allocation8 + $0x18] sm:$0xff]
    %v829 = vld [vmem:[#allocation8 + $0x20] sm:$0xf]
    %v830 = vld [vmem:[#allocation8 + $0x24] sm:$0xff]
    %v831 = vld [vmem:[#allocation8 + $0x2c] sm:$0xf]
    %v832 = vld [vmem:[#allocation8 + $0x30] sm:$0xff]
    %v833 = vld [vmem:[#allocation8 + $0x38] sm:$0xf]
    %v834 = vld [vmem:[#allocation8 + $0x3c] sm:$0xff]
    %v835 = vld [vmem:[#allocation8 + $0x44] sm:$0xf]
    %v836 = vld [vmem:[#allocation8 + $0x48] sm:$0xff]
    %v837 = vld [vmem:[#allocation8 + $0x50] sm:$0xf]
    %v838 = vld [vmem:[#allocation8 + $0x54] sm:$0xff]
    %v839 = vld [vmem:[#allocation8 + $0x5c] sm:$0xf]
    %v840 = vld [vmem:[#allocation8 + $0x60] sm:$0xff]
    %v841 = vld [vmem:[#allocation8 + $0x68] sm:$0xf]
    %v842 = vld [vmem:[#allocation8 + $0x6c] sm:$0xff]
    %v843 = vld [vmem:[#allocation8 + $0x74] sm:$0xf]
    %v844 = vld [vmem:[#allocation8 + $0x78] sm:$0xff]
    %v845 = vld [vmem:[#allocation8 + $0x80] sm:$0xf]
    %v846 = vld [vmem:[#allocation8 + $0x84] sm:$0xff]
    %v847 = vld [vmem:[#allocation8 + $0x8c] sm:$0xf]
    %v848 = vld [vmem:[#allocation8 + $0x90] sm:$0xff]
    %v849 = vld [vmem:[#allocation8 + $0x98] sm:$0xf]
    %v850 = vld [vmem:[#allocation8 + $0x9c] sm:$0xff]
    %v851 = vld [vmem:[#allocation8 + $0xa4] sm:$0xf]
    %v852 = vld [vmem:[#allocation8 + $0xa8] sm:$0xff]
    %v853 = vld [vmem:[#allocation8 + $0xb0] sm:$0xf]
    %v854 = vld [vmem:[#allocation8 + $0xb4] sm:$0xff]
    %v855 = vld [vmem:[#allocation8 + $0xbc] sm:$0xf]
    %v888 = vunpack.c.l.b16 %v824
    %v889 = vunpack.c.h.b16 %v824
    %v890 = vunpack.c.l.b16 %v825
    %v891 = vunpack.c.l.b16 %v826
    %v892 = vunpack.c.h.b16 %v826
    %v893 = vunpack.c.l.b16 %v827
    %v894 = vunpack.c.l.b16 %v828
    %v895 = vunpack.c.h.b16 %v828
    %v896 = vunpack.c.l.b16 %v829
    %v897 = vunpack.c.l.b16 %v830
    %v898 = vunpack.c.h.b16 %v830
    %v899 = vunpack.c.l.b16 %v831
    %v900 = vunpack.c.l.b16 %v832
    %v901 = vunpack.c.h.b16 %v832
    %v902 = vunpack.c.l.b16 %v833
    %v903 = vunpack.c.l.b16 %v834
    %v904 = vunpack.c.h.b16 %v834
    %v905 = vunpack.c.l.b16 %v835
    %v906 = vunpack.c.l.b16 %v836
    %v907 = vunpack.c.h.b16 %v836
    %v908 = vunpack.c.l.b16 %v837
    %v909 = vunpack.c.l.b16 %v838
    %v910 = vunpack.c.h.b16 %v838
    %v911 = vunpack.c.l.b16 %v839
    %v912 = vunpack.c.l.b16 %v840
    %v913 = vunpack.c.h.b16 %v840
    %v914 = vunpack.c.l.b16 %v841
    %v915 = vunpack.c.l.b16 %v842
    %v916 = vunpack.c.h.b16 %v842
    %v917 = vunpack.c.l.b16 %v843
    %v918 = vunpack.c.l.b16 %v844
    %v919 = vunpack.c.h.b16 %v844
    %v920 = vunpack.c.l.b16 %v845
    %v921 = vunpack.c.l.b16 %v846
    %v922 = vunpack.c.h.b16 %v846
    %v923 = vunpack.c.l.b16 %v847
    %v924 = vunpack.c.l.b16 %v848
    %v925 = vunpack.c.h.b16 %v848
    %v926 = vunpack.c.l.b16 %v849
    %v927 = vunpack.c.l.b16 %v850
    %v928 = vunpack.c.h.b16 %v850
    %v929 = vunpack.c.l.b16 %v851
    %v930 = vunpack.c.l.b16 %v852
    %v931 = vunpack.c.h.b16 %v852
    %v932 = vunpack.c.l.b16 %v853
    %v933 = vunpack.c.l.b16 %v854
    %v934 = vunpack.c.h.b16 %v854
    %v935 = vunpack.c.l.b16 %v855
    %v936 = vpack.c.b16 %v891, %v888
    %v937 = vpack.c.b16 %v892, %v889
    %v938 = vpack.c.b16 %v893, %v890
    %v939 = vpack.c.b16 %v897, %v894
    %v940 = vpack.c.b16 %v898, %v895
    %v941 = vpack.c.b16 %v899, %v896
    %v942 = vpack.c.b16 %v903, %v900
    %v943 = vpack.c.b16 %v904, %v901
    %v944 = vpack.c.b16 %v905, %v902
    %v945 = vpack.c.b16 %v909, %v906
    %v946 = vpack.c.b16 %v910, %v907
    %v947 = vpack.c.b16 %v911, %v908
    %v948 = vpack.c.b16 %v915, %v912
    %v949 = vpack.c.b16 %v916, %v913
    %v950 = vpack.c.b16 %v917, %v914
    %v951 = vpack.c.b16 %v921, %v918
    %v952 = vpack.c.b16 %v922, %v919
    %v953 = vpack.c.b16 %v923, %v920
    %v954 = vpack.c.b16 %v927, %v924
    %v955 = vpack.c.b16 %v928, %v925
    %v956 = vpack.c.b16 %v929, %v926
    %v957 = vpack.c.b16 %v933, %v930
    %v958 = vpack.c.b16 %v934, %v931
    %v959 = vpack.c.b16 %v935, %v932
    %984 = vmatprep.subr.bf16.mxu0 %v958
    %985 = vmatpush1.bf16.msra.mxu0 %v957
    %986 = vmatprep.subr.bf16.mxu0 %v955
    %987 = vmatpush1.bf16.msra.mxu0 %v954
    %988 = vmatprep.subr.bf16.mxu0 %v952
    %989 = vmatpush1.bf16.msra.mxu0 %v951
    %990 = vmatprep.subr.bf16.mxu0 %v949
    %991 = vmatpush1.bf16.msra.mxu0 %v948
    %992 = vmatprep.subr.bf16.mxu0 %v946
    %993 = vmatpush1.bf16.msra.mxu0 %v945
    %994 = vmatprep.subr.bf16.mxu0 %v943
    %995 = vmatpush1.bf16.msra.mxu0 %v942
    %996 = vmatprep.subr.bf16.mxu0 %v940
    %997 = vmatpush1.bf16.msra.mxu0 %v939
    %998 = vmatprep.subr.bf16.mxu0 %v937
    %999 = vmatpush1.bf16.msra.mxu0 %v936
    %1000 = vmatprep.subr.bf16.mxu0 0
    %1001 = vmatpush2.bf16.msra.mxu0 0
    %1002 = vmatprep.subr.bf16.mxu0 0
    %1003 = vmatpush2.bf16.msra.mxu0 0
    %1004 = vmatprep.subr.bf16.mxu0 0
    %1005 = vmatpush2.bf16.msra.mxu0 0
    %1006 = vmatprep.subr.bf16.mxu0 0
    %1007 = vmatpush2.bf16.msra.mxu0 0
    %1008 = vmatprep.subr.bf16.mxu0 0
    %1009 = vmatpush2.bf16.msra.mxu0 0
    %1010 = vmatprep.subr.bf16.mxu0 0
    %1011 = vmatpush2.bf16.msra.mxu0 0
    %1012 = vmatprep.subr.bf16.mxu0 0
    %1013 = vmatpush2.bf16.msra.mxu0 0
    %1014 = vmatprep.subr.bf16.mxu0 0
    %1015 = vmatpush2.bf16.msra.mxu0 0
    %1016 = vmatprep.mubr.bf16.mxu0 0
    %1017 = vmatmul.mubr.bf16.gmra.mxu0 %v110
    %v1018 = vpop.f32.mrf.mxu0
    %v1019 = vadd.f32 0.0, %v1018
    %v1020 = vpop.f32.mrf.mxu0
    %v1021 = vadd.f32 0.0, %v1020
    %v1022 = vpop.f32.mrf.mxu0
    %v1023 = vadd.f32 0.0, %v1022
    %v1024 = vpop.f32.mrf.mxu0
    %v1025 = vadd.f32 0.0, %v1024
    %1026 = vmatprep.mubr.bf16.mxu0 0
    %1027 = vmatmul.mubr.bf16.gmra.mxu0 %v111
    %v1028 = vpop.f32.mrf.mxu0
    %v1029 = vadd.f32 0.0, %v1028
    %v1030 = vpop.f32.mrf.mxu0
    %v1031 = vadd.f32 0.0, %v1030
    %v1032 = vpop.f32.mrf.mxu0
    %v1033 = vadd.f32 0.0, %v1032
    %v1034 = vpop.f32.mrf.mxu0
    %v1035 = vadd.f32 0.0, %v1034
    %1036 = vmatprep.mubr.bf16.mxu0 0
    %1037 = vmatmul.mubr.bf16.gmra.mxu0 %v112
    %v1038 = vpop.f32.mrf.mxu0
    %v1039 = vadd.f32 0.0, %v1038
    %v1040 = vpop.f32.mrf.mxu0
    %v1041 = vadd.f32 0.0, %v1040
    %v1042 = vpop.f32.mrf.mxu0
    %v1043 = vadd.f32 0.0, %v1042
    %v1044 = vpop.f32.mrf.mxu0
    %v1045 = vadd.f32 0.0, %v1044
    %1046 = vmatprep.mubr.bf16.mxu0 0
    %1047 = vmatmul.mubr.bf16.gmra.mxu0 %v113
    %v1048 = vpop.f32.mrf.mxu0
    %v1049 = vadd.f32 0.0, %v1048
    %v1050 = vpop.f32.mrf.mxu0
    %v1051 = vadd.f32 0.0, %v1050
    %v1052 = vpop.f32.mrf.mxu0
    %v1053 = vadd.f32 0.0, %v1052
    %v1054 = vpop.f32.mrf.mxu0
    %v1055 = vadd.f32 0.0, %v1054
    %1056 = vmatprep.mubr.bf16.mxu0 0
    %1057 = vmatmul.mubr.bf16.gmra.mxu0 %v114
    %v1058 = vpop.f32.mrf.mxu0
    %v1059 = vadd.f32 0.0, %v1058
    %v1060 = vpop.f32.mrf.mxu0
    %v1061 = vadd.f32 0.0, %v1060
    %v1062 = vpop.f32.mrf.mxu0
    %v1063 = vadd.f32 0.0, %v1062
    %v1064 = vpop.f32.mrf.mxu0
    %v1065 = vadd.f32 0.0, %v1064
    %1066 = vmatprep.mubr.bf16.mxu0 0
    %1067 = vmatmul.mubr.bf16.gmra.mxu0 %v115
    %v1068 = vpop.f32.mrf.mxu0
    %v1069 = vadd.f32 0.0, %v1068
    %v1070 = vpop.f32.mrf.mxu0
    %v1071 = vadd.f32 0.0, %v1070
    %v1072 = vpop.f32.mrf.mxu0
    %v1073 = vadd.f32 0.0, %v1072
    %v1074 = vpop.f32.mrf.mxu0
    %v1075 = vadd.f32 0.0, %v1074
    %1076 = vmatprep.mubr.bf16.mxu0 0
    %1077 = vmatmul.mubr.bf16.gmra.mxu0 %v116
    %v1078 = vpop.f32.mrf.mxu0
    %v1079 = vadd.f32 0.0, %v1078
    %v1080 = vpop.f32.mrf.mxu0
    %v1081 = vadd.f32 0.0, %v1080
    %v1082 = vpop.f32.mrf.mxu0
    %v1083 = vadd.f32 0.0, %v1082
    %v1084 = vpop.f32.mrf.mxu0
    %v1085 = vadd.f32 0.0, %v1084
    %1086 = vmatprep.mubr.bf16.mxu0 0
    %1087 = vmatmul.mubr.bf16.gmra.mxu0 %v117
    %v1088 = vpop.f32.mrf.mxu0
    %v1089 = vadd.f32 0.0, %v1088
    %v1090 = vpop.f32.mrf.mxu0
    %v1091 = vadd.f32 0.0, %v1090
    %v1092 = vpop.f32.mrf.mxu0
    %v1093 = vadd.f32 0.0, %v1092
    %v1094 = vpop.f32.mrf.mxu0
    %v1095 = vadd.f32 0.0, %v1094
    %1096 = vdwg.mxu0
    %1097 = vmatprep.subr.bf16.mxu0 0
    %1098 = vmatpush1.bf16.msra.mxu0 %v959
    %1099 = vmatprep.subr.bf16.mxu0 0
    %1100 = vmatpush1.bf16.msra.mxu0 %v956
    %1101 = vmatprep.subr.bf16.mxu0 0
    %1102 = vmatpush1.bf16.msra.mxu0 %v953
    %1103 = vmatprep.subr.bf16.mxu0 0
    %1104 = vmatpush1.bf16.msra.mxu0 %v950
    %1105 = vmatprep.subr.bf16.mxu0 0
    %1106 = vmatpush1.bf16.msra.mxu0 %v947
    %1107 = vmatprep.subr.bf16.mxu0 0
    %1108 = vmatpush1.bf16.msra.mxu0 %v944
    %1109 = vmatprep.subr.bf16.mxu0 0
    %1110 = vmatpush1.bf16.msra.mxu0 %v941
    %1111 = vmatprep.subr.bf16.mxu0 0
    %1112 = vmatpush1.bf16.msra.mxu0 %v938
    %1113 = vmatprep.subr.bf16.mxu0 0
    %1114 = vmatpush2.bf16.msra.mxu0 0
    %1115 = vmatprep.subr.bf16.mxu0 0
    %1116 = vmatpush2.bf16.msra.mxu0 0
    %1117 = vmatprep.subr.bf16.mxu0 0
    %1118 = vmatpush2.bf16.msra.mxu0 0
    %1119 = vmatprep.subr.bf16.mxu0 0
    %1120 = vmatpush2.bf16.msra.mxu0 0
    %1121 = vmatprep.subr.bf16.mxu0 0
    %1122 = vmatpush2.bf16.msra.mxu0 0
    %1123 = vmatprep.subr.bf16.mxu0 0
    %1124 = vmatpush2.bf16.msra.mxu0 0
    %1125 = vmatprep.subr.bf16.mxu0 0
    %1126 = vmatpush2.bf16.msra.mxu0 0
    %1127 = vmatprep.subr.bf16.mxu0 0
    %1128 = vmatpush2.bf16.msra.mxu0 0
    %1129 = vmatprep.mubr.bf16.mxu0 0
    %1130 = vmatmul.mubr.bf16.gmra.mxu0 %v110
    %v1131 = vpop.f32.mrf.mxu0
    %v1132 = vadd.f32 0.0, %v1131
    %v1133 = vpop.f32.mrf.mxu0
    %v1134 = vpop.f32.mrf.mxu0
    %v1135 = vadd.f32 0.0, %v1134
    %v1136 = vpop.f32.mrf.mxu0
    %1137 = vmatprep.mubr.bf16.mxu0 0
    %1138 = vmatmul.mubr.bf16.gmra.mxu0 %v111
    %v1139 = vpop.f32.mrf.mxu0
    %v1140 = vadd.f32 0.0, %v1139
    %v1141 = vpop.f32.mrf.mxu0
    %v1142 = vpop.f32.mrf.mxu0
    %v1143 = vadd.f32 0.0, %v1142
    %v1144 = vpop.f32.mrf.mxu0
    %1145 = vmatprep.mubr.bf16.mxu0 0
    %1146 = vmatmul.mubr.bf16.gmra.mxu0 %v112
    %v1147 = vpop.f32.mrf.mxu0
    %v1148 = vadd.f32 0.0, %v1147
    %v1149 = vpop.f32.mrf.mxu0
    %v1150 = vpop.f32.mrf.mxu0
    %v1151 = vadd.f32 0.0, %v1150
    %v1152 = vpop.f32.mrf.mxu0
    %1153 = vmatprep.mubr.bf16.mxu0 0
    %1154 = vmatmul.mubr.bf16.gmra.mxu0 %v113
    %v1155 = vpop.f32.mrf.mxu0
    %v1156 = vadd.f32 0.0, %v1155
    %v1157 = vpop.f32.mrf.mxu0
    %v1158 = vpop.f32.mrf.mxu0
    %v1159 = vadd.f32 0.0, %v1158
    %v1160 = vpop.f32.mrf.mxu0
    %1161 = vmatprep.mubr.bf16.mxu0 0
    %1162 = vmatmul.mubr.bf16.gmra.mxu0 %v114
    %v1163 = vpop.f32.mrf.mxu0
    %v1164 = vadd.f32 0.0, %v1163
    %v1165 = vpop.f32.mrf.mxu0
    %v1166 = vpop.f32.mrf.mxu0
    %v1167 = vadd.f32 0.0, %v1166
    %v1168 = vpop.f32.mrf.mxu0
    %1169 = vmatprep.mubr.bf16.mxu0 0
    %1170 = vmatmul.mubr.bf16.gmra.mxu0 %v115
    %v1171 = vpop.f32.mrf.mxu0
    %v1172 = vadd.f32 0.0, %v1171
    %v1173 = vpop.f32.mrf.mxu0
    %v1174 = vpop.f32.mrf.mxu0
    %v1175 = vadd.f32 0.0, %v1174
    %v1176 = vpop.f32.mrf.mxu0
    %1177 = vmatprep.mubr.bf16.mxu0 0
    %1178 = vmatmul.mubr.bf16.gmra.mxu0 %v116
    %v1179 = vpop.f32.mrf.mxu0
    %v1180 = vadd.f32 0.0, %v1179
    %v1181 = vpop.f32.mrf.mxu0
    %v1182 = vpop.f32.mrf.mxu0
    %v1183 = vadd.f32 0.0, %v1182
    %v1184 = vpop.f32.mrf.mxu0
    %1185 = vmatprep.mubr.bf16.mxu0 0
    %1186 = vmatmul.mubr.bf16.gmra.mxu0 %v117
    %v1187 = vpop.f32.mrf.mxu0
    %v1188 = vadd.f32 0.0, %v1187
    %v1189 = vpop.f32.mrf.mxu0
    %v1190 = vpop.f32.mrf.mxu0
    %v1191 = vadd.f32 0.0, %v1190
    %v1192 = vpop.f32.mrf.mxu0
    %1193 = vdwg.mxu0
    %v1194 = vmul.f32 %v776, %v1019
    %v1195 = vmul.f32 %v777, %v1021
    %v1196 = vmul.f32 %v778, %v1132
    %v1197 = vmul.f32 %v779, %v1023
    %v1198 = vmul.f32 %v780, %v1025
    %v1199 = vmul.f32 %v781, %v1135
    %v1200 = vmul.f32 %v782, %v1029
    %v1201 = vmul.f32 %v783, %v1031
    %v1202 = vmul.f32 %v784, %v1140
    %v1203 = vmul.f32 %v785, %v1033
    %v1204 = vmul.f32 %v786, %v1035
    %v1205 = vmul.f32 %v787, %v1143
    %v1206 = vmul.f32 %v788, %v1039
    %v1207 = vmul.f32 %v789, %v1041
    %v1208 = vmul.f32 %v790, %v1148
    %v1209 = vmul.f32 %v791, %v1043
    %v1210 = vmul.f32 %v792, %v1045
    %v1211 = vmul.f32 %v793, %v1151
    %v1212 = vmul.f32 %v794, %v1049
    %v1213 = vmul.f32 %v795, %v1051
    %v1214 = vmul.f32 %v796, %v1156
    %v1215 = vmul.f32 %v797, %v1053
    %v1216 = vmul.f32 %v798, %v1055
    %v1217 = vmul.f32 %v799, %v1159
    %v1218 = vmul.f32 %v800, %v1059
    %v1219 = vmul.f32 %v801, %v1061
    %v1220 = vmul.f32 %v802, %v1164
    %v1221 = vmul.f32 %v803, %v1063
    %v1222 = vmul.f32 %v804, %v1065
    %v1223 = vmul.f32 %v805, %v1167
    %v1224 = vmul.f32 %v806, %v1069
    %v1225 = vmul.f32 %v807, %v1071
    %v1226 = vmul.f32 %v808, %v1172
    %v1227 = vmul.f32 %v809, %v1073
    %v1228 = vmul.f32 %v810, %v1075
    %v1229 = vmul.f32 %v811, %v1175
    %v1230 = vmul.f32 %v812, %v1079
    %v1231 = vmul.f32 %v813, %v1081
    %v1232 = vmul.f32 %v814, %v1180
    %v1233 = vmul.f32 %v815, %v1083
    %v1234 = vmul.f32 %v816, %v1085
    %v1235 = vmul.f32 %v817, %v1183
    %v1236 = vmul.f32 %v818, %v1089
    %v1237 = vmul.f32 %v819, %v1091
    %v1238 = vmul.f32 %v820, %v1188
    %v1239 = vmul.f32 %v821, %v1093
    %v1240 = vmul.f32 %v822, %v1095
    %v1241 = vmul.f32 %v823, %v1191
    %v1242 = vpack.c.bf16 %v1197, %v1194
    %v1243 = vpack.c.bf16 %v1198, %v1195
    %v1244 = vpack.c.bf16 %v1199, %v1196
    %v1245 = vpack.c.bf16 %v1203, %v1200
    %v1246 = vpack.c.bf16 %v1204, %v1201
    %v1247 = vpack.c.bf16 %v1205, %v1202
    %v1248 = vpack.c.bf16 %v1209, %v1206
    %v1249 = vpack.c.bf16 %v1210, %v1207
    %v1250 = vpack.c.bf16 %v1211, %v1208
    %v1251 = vpack.c.bf16 %v1215, %v1212
    %v1252 = vpack.c.bf16 %v1216, %v1213
    %v1253 = vpack.c.bf16 %v1217, %v1214
    %v1254 = vpack.c.bf16 %v1221, %v1218
    %v1255 = vpack.c.bf16 %v1222, %v1219
    %v1256 = vpack.c.bf16 %v1223, %v1220
    %v1257 = vpack.c.bf16 %v1227, %v1224
    %v1258 = vpack.c.bf16 %v1228, %v1225
    %v1259 = vpack.c.bf16 %v1229, %v1226
    %v1260 = vpack.c.bf16 %v1233, %v1230
    %v1261 = vpack.c.bf16 %v1234, %v1231
    %v1262 = vpack.c.bf16 %v1235, %v1232
    %v1263 = vpack.c.bf16 %v1239, %v1236
    %v1264 = vpack.c.bf16 %v1240, %v1237
    %v1265 = vpack.c.bf16 %v1241, %v1238
    %v1266 = vld [vmem:[#allocation2] sm:$0xff]
    %v1267 = vld [vmem:[#allocation2 + $0x8] sm:$0xff]
    %v1268 = vld [vmem:[#allocation2 + $0x10] sm:$0xff]
    %v1269 = vld [vmem:[#allocation2 + $0x18] sm:$0xff]
    %v1270 = vld [vmem:[#allocation2 + $0x20] sm:$0xff]
    %v1271 = vld [vmem:[#allocation2 + $0x28] sm:$0xff]
    %v1272 = vld [vmem:[#allocation2 + $0x30] sm:$0xff]
    %v1273 = vld [vmem:[#allocation2 + $0x38] sm:$0xff]
    %v1274 = vld [vmem:[#allocation2 + $0x40] sm:$0xff]
    %v1275 = vld [vmem:[#allocation2 + $0x48] sm:$0xff]
    %v1276 = vld [vmem:[#allocation2 + $0x50] sm:$0xff]
    %v1277 = vld [vmem:[#allocation2 + $0x58] sm:$0xff]
    %v1278 = vld [vmem:[#allocation2 + $0x60] sm:$0xff]
    %v1279 = vld [vmem:[#allocation2 + $0x68] sm:$0xff]
    %v1280 = vld [vmem:[#allocation2 + $0x70] sm:$0xff]
    %v1281 = vld [vmem:[#allocation2 + $0x78] sm:$0xff]
    %v1282 = vld [vmem:[#allocation9] sm:$0xf]
    %v1283 = vld [vmem:[#allocation9 + $0x4] sm:$0xf]
    %v1284 = vld [vmem:[#allocation9 + $0x8] sm:$0xf]
    %v1285 = vld [vmem:[#allocation9 + $0xc] sm:$0xf]
    %v1286 = vld [vmem:[#allocation9 + $0x10] sm:$0xf]
    %v1287 = vld [vmem:[#allocation9 + $0x14] sm:$0xf]
    %v1288 = vld [vmem:[#allocation9 + $0x18] sm:$0xf]
    %v1289 = vld [vmem:[#allocation9 + $0x1c] sm:$0xf]
    %v1290 = vld [vmem:[#allocation9 + $0x20] sm:$0xf]
    %v1291 = vld [vmem:[#allocation9 + $0x24] sm:$0xf]
    %v1292 = vld [vmem:[#allocation9 + $0x28] sm:$0xf]
    %v1293 = vld [vmem:[#allocation9 + $0x2c] sm:$0xf]
    %v1294 = vld [vmem:[#allocation9 + $0x30] sm:$0xf]
    %v1295 = vld [vmem:[#allocation9 + $0x34] sm:$0xf]
    %v1296 = vld [vmem:[#allocation9 + $0x38] sm:$0xf]
    %v1297 = vld [vmem:[#allocation9 + $0x3c] sm:$0xf]
    %v1298 = vld [vmem:[#allocation9 + $0x40] sm:$0xf]
    %v1299 = vld [vmem:[#allocation9 + $0x44] sm:$0xf]
    %v1300 = vld [vmem:[#allocation9 + $0x48] sm:$0xf]
    %v1301 = vld [vmem:[#allocation9 + $0x4c] sm:$0xf]
    %v1302 = vld [vmem:[#allocation9 + $0x50] sm:$0xf]
    %v1303 = vld [vmem:[#allocation9 + $0x54] sm:$0xf]
    %v1304 = vld [vmem:[#allocation9 + $0x58] sm:$0xf]
    %v1305 = vld [vmem:[#allocation9 + $0x5c] sm:$0xf]
    %v1306 = vld [vmem:[#allocation9 + $0x60] sm:$0xf]
    %v1307 = vld [vmem:[#allocation9 + $0x64] sm:$0xf]
    %v1308 = vld [vmem:[#allocation9 + $0x68] sm:$0xf]
    %v1309 = vld [vmem:[#allocation9 + $0x6c] sm:$0xf]
    %v1310 = vld [vmem:[#allocation9 + $0x70] sm:$0xf]
    %v1311 = vld [vmem:[#allocation9 + $0x74] sm:$0xf]
    %v1312 = vld [vmem:[#allocation9 + $0x78] sm:$0xf]
    %v1313 = vld [vmem:[#allocation9 + $0x7c] sm:$0xf]
    %v1314 = vld [vmem:[#allocation9 + $0x80] sm:$0xf]
    %v1315 = vld [vmem:[#allocation9 + $0x84] sm:$0xf]
    %v1316 = vld [vmem:[#allocation9 + $0x88] sm:$0xf]
    %v1317 = vld [vmem:[#allocation9 + $0x8c] sm:$0xf]
    %v1318 = vld [vmem:[#allocation9 + $0x90] sm:$0xf]
    %v1319 = vld [vmem:[#allocation9 + $0x94] sm:$0xf]
    %v1320 = vld [vmem:[#allocation9 + $0x98] sm:$0xf]
    %v1321 = vld [vmem:[#allocation9 + $0x9c] sm:$0xf]
    %v1322 = vld [vmem:[#allocation9 + $0xa0] sm:$0xf]
    %v1323 = vld [vmem:[#allocation9 + $0xa4] sm:$0xf]
    %v1324 = vld [vmem:[#allocation9 + $0xa8] sm:$0xf]
    %v1325 = vld [vmem:[#allocation9 + $0xac] sm:$0xf]
    %v1326 = vld [vmem:[#allocation9 + $0xb0] sm:$0xf]
    %v1327 = vld [vmem:[#allocation9 + $0xb4] sm:$0xf]
    %v1328 = vld [vmem:[#allocation9 + $0xb8] sm:$0xf]
    %v1329 = vld [vmem:[#allocation9 + $0xbc] sm:$0xf]
    %v1378 = vunpack.c.l.b16 %v1282
    %v1379 = vunpack.c.l.b16 %v1283
    %v1380 = vunpack.c.l.b16 %v1284
    %v1381 = vunpack.c.l.b16 %v1285
    %v1382 = vunpack.c.l.b16 %v1286
    %v1383 = vunpack.c.l.b16 %v1287
    %v1384 = vunpack.c.l.b16 %v1288
    %v1385 = vunpack.c.l.b16 %v1289
    %v1386 = vunpack.c.l.b16 %v1290
    %v1387 = vunpack.c.l.b16 %v1291
    %v1388 = vunpack.c.l.b16 %v1292
    %v1389 = vunpack.c.l.b16 %v1293
    %v1390 = vunpack.c.l.b16 %v1294
    %v1391 = vunpack.c.l.b16 %v1295
    %v1392 = vunpack.c.l.b16 %v1296
    %v1393 = vunpack.c.l.b16 %v1297
    %v1394 = vunpack.c.l.b16 %v1298
    %v1395 = vunpack.c.l.b16 %v1299
    %v1396 = vunpack.c.l.b16 %v1300
    %v1397 = vunpack.c.l.b16 %v1301
    %v1398 = vunpack.c.l.b16 %v1302
    %v1399 = vunpack.c.l.b16 %v1303
    %v1400 = vunpack.c.l.b16 %v1304
    %v1401 = vunpack.c.l.b16 %v1305
    %v1402 = vunpack.c.l.b16 %v1306
    %v1403 = vunpack.c.l.b16 %v1307
    %v1404 = vunpack.c.l.b16 %v1308
    %v1405 = vunpack.c.l.b16 %v1309
    %v1406 = vunpack.c.l.b16 %v1310
    %v1407 = vunpack.c.l.b16 %v1311
    %v1408 = vunpack.c.l.b16 %v1312
    %v1409 = vunpack.c.l.b16 %v1313
    %v1410 = vunpack.c.l.b16 %v1314
    %v1411 = vunpack.c.l.b16 %v1315
    %v1412 = vunpack.c.l.b16 %v1316
    %v1413 = vunpack.c.l.b16 %v1317
    %v1414 = vunpack.c.l.b16 %v1318
    %v1415 = vunpack.c.l.b16 %v1319
    %v1416 = vunpack.c.l.b16 %v1320
    %v1417 = vunpack.c.l.b16 %v1321
    %v1418 = vunpack.c.l.b16 %v1322
    %v1419 = vunpack.c.l.b16 %v1323
    %v1420 = vunpack.c.l.b16 %v1324
    %v1421 = vunpack.c.l.b16 %v1325
    %v1422 = vunpack.c.l.b16 %v1326
    %v1423 = vunpack.c.l.b16 %v1327
    %v1424 = vunpack.c.l.b16 %v1328
    %v1425 = vunpack.c.l.b16 %v1329
    %v1426 = vpack.c.b16 %v1379, %v1378
    %v1427 = vpack.c.b16 %v1381, %v1380
    %v1428 = vpack.c.b16 %v1383, %v1382
    %v1429 = vpack.c.b16 %v1385, %v1384
    %v1430 = vpack.c.b16 %v1387, %v1386
    %v1431 = vpack.c.b16 %v1389, %v1388
    %v1432 = vpack.c.b16 %v1391, %v1390
    %v1433 = vpack.c.b16 %v1393, %v1392
    %v1434 = vpack.c.b16 %v1395, %v1394
    %v1435 = vpack.c.b16 %v1397, %v1396
    %v1436 = vpack.c.b16 %v1399, %v1398
    %v1437 = vpack.c.b16 %v1401, %v1400
    %v1438 = vpack.c.b16 %v1403, %v1402
    %v1439 = vpack.c.b16 %v1405, %v1404
    %v1440 = vpack.c.b16 %v1407, %v1406
    %v1441 = vpack.c.b16 %v1409, %v1408
    %v1442 = vpack.c.b16 %v1411, %v1410
    %v1443 = vpack.c.b16 %v1413, %v1412
    %v1444 = vpack.c.b16 %v1415, %v1414
    %v1445 = vpack.c.b16 %v1417, %v1416
    %v1446 = vpack.c.b16 %v1419, %v1418
    %v1447 = vpack.c.b16 %v1421, %v1420
    %v1448 = vpack.c.b16 %v1423, %v1422
    %v1449 = vpack.c.b16 %v1425, %v1424
    %1474 = vmatprep.subr.bf16.mxu0 0
    %1475 = vmatpush1.bf16.msra.mxu0 %v1433
    %1476 = vmatprep.subr.bf16.mxu0 0
    %1477 = vmatpush1.bf16.msra.mxu0 %v1432
    %1478 = vmatprep.subr.bf16.mxu0 0
    %1479 = vmatpush1.bf16.msra.mxu0 %v1431
    %1480 = vmatprep.subr.bf16.mxu0 0
    %1481 = vmatpush1.bf16.msra.mxu0 %v1430
    %1482 = vmatprep.subr.bf16.mxu0 0
    %1483 = vmatpush1.bf16.msra.mxu0 %v1429
    %1484 = vmatprep.subr.bf16.mxu0 0
    %1485 = vmatpush1.bf16.msra.mxu0 %v1428
    %1486 = vmatprep.subr.bf16.mxu0 0
    %1487 = vmatpush1.bf16.msra.mxu0 %v1427
    %1488 = vmatprep.subr.bf16.mxu0 0
    %1489 = vmatpush1.bf16.msra.mxu0 %v1426
    %1490 = vmatprep.subr.bf16.mxu0 0
    %1491 = vmatpush2.bf16.msra.mxu0 %v1441
    %1492 = vmatprep.subr.bf16.mxu0 0
    %1493 = vmatpush2.bf16.msra.mxu0 %v1440
    %1494 = vmatprep.subr.bf16.mxu0 0
    %1495 = vmatpush2.bf16.msra.mxu0 %v1439
    %1496 = vmatprep.subr.bf16.mxu0 0
    %1497 = vmatpush2.bf16.msra.mxu0 %v1438
    %1498 = vmatprep.subr.bf16.mxu0 0
    %1499 = vmatpush2.bf16.msra.mxu0 %v1437
    %1500 = vmatprep.subr.bf16.mxu0 0
    %1501 = vmatpush2.bf16.msra.mxu0 %v1436
    %1502 = vmatprep.subr.bf16.mxu0 0
    %1503 = vmatpush2.bf16.msra.mxu0 %v1435
    %1504 = vmatprep.subr.bf16.mxu0 0
    %1505 = vmatpush2.bf16.msra.mxu0 %v1434
    %1506 = vmatprep.mubr.bf16.mxu0 %v1243
    %1507 = vmatmul.mubr.bf16.gmra.mxu0 %v1242
    %v1508 = vpop.f32.mrf.mxu0
    %v1509 = vadd.f32 0.0, %v1508
    %v1510 = vpop.f32.mrf.mxu0
    %v1511 = vpop.f32.mrf.mxu0
    %v1512 = vadd.f32 0.0, %v1511
    %v1513 = vpop.f32.mrf.mxu0
    %1514 = vmatprep.mubr.bf16.mxu0 %v1246
    %1515 = vmatmul.mubr.bf16.gmra.mxu0 %v1245
    %v1516 = vpop.f32.mrf.mxu0
    %v1517 = vadd.f32 0.0, %v1516
    %v1518 = vpop.f32.mrf.mxu0
    %v1519 = vpop.f32.mrf.mxu0
    %v1520 = vadd.f32 0.0, %v1519
    %v1521 = vpop.f32.mrf.mxu0
    %1522 = vmatprep.mubr.bf16.mxu0 %v1249
    %1523 = vmatmul.mubr.bf16.gmra.mxu0 %v1248
    %v1524 = vpop.f32.mrf.mxu0
    %v1525 = vadd.f32 0.0, %v1524
    %v1526 = vpop.f32.mrf.mxu0
    %v1527 = vpop.f32.mrf.mxu0
    %v1528 = vadd.f32 0.0, %v1527
    %v1529 = vpop.f32.mrf.mxu0
    %1530 = vmatprep.mubr.bf16.mxu0 %v1252
    %1531 = vmatmul.mubr.bf16.gmra.mxu0 %v1251
    %v1532 = vpop.f32.mrf.mxu0
    %v1533 = vadd.f32 0.0, %v1532
    %v1534 = vpop.f32.mrf.mxu0
    %v1535 = vpop.f32.mrf.mxu0
    %v1536 = vadd.f32 0.0, %v1535
    %v1537 = vpop.f32.mrf.mxu0
    %1538 = vmatprep.mubr.bf16.mxu0 %v1255
    %1539 = vmatmul.mubr.bf16.gmra.mxu0 %v1254
    %v1540 = vpop.f32.mrf.mxu0
    %v1541 = vadd.f32 0.0, %v1540
    %v1542 = vpop.f32.mrf.mxu0
    %v1543 = vpop.f32.mrf.mxu0
    %v1544 = vadd.f32 0.0, %v1543
    %v1545 = vpop.f32.mrf.mxu0
    %1546 = vmatprep.mubr.bf16.mxu0 %v1258
    %1547 = vmatmul.mubr.bf16.gmra.mxu0 %v1257
    %v1548 = vpop.f32.mrf.mxu0
    %v1549 = vadd.f32 0.0, %v1548
    %v1550 = vpop.f32.mrf.mxu0
    %v1551 = vpop.f32.mrf.mxu0
    %v1552 = vadd.f32 0.0, %v1551
    %v1553 = vpop.f32.mrf.mxu0
    %1554 = vmatprep.mubr.bf16.mxu0 %v1261
    %1555 = vmatmul.mubr.bf16.gmra.mxu0 %v1260
    %v1556 = vpop.f32.mrf.mxu0
    %v1557 = vadd.f32 0.0, %v1556
    %v1558 = vpop.f32.mrf.mxu0
    %v1559 = vpop.f32.mrf.mxu0
    %v1560 = vadd.f32 0.0, %v1559
    %v1561 = vpop.f32.mrf.mxu0
    %1562 = vmatprep.mubr.bf16.mxu0 %v1264
    %1563 = vmatmul.mubr.bf16.gmra.mxu0 %v1263
    %v1564 = vpop.f32.mrf.mxu0
    %v1565 = vadd.f32 0.0, %v1564
    %v1566 = vpop.f32.mrf.mxu0
    %v1567 = vpop.f32.mrf.mxu0
    %v1568 = vadd.f32 0.0, %v1567
    %v1569 = vpop.f32.mrf.mxu0
    %1570 = vdwg.mxu0
    %1571 = vmatprep.subr.bf16.mxu0 0
    %1572 = vmatpush1.bf16.msra.mxu0 %v1449
    %1573 = vmatprep.subr.bf16.mxu0 0
    %1574 = vmatpush1.bf16.msra.mxu0 %v1448
    %1575 = vmatprep.subr.bf16.mxu0 0
    %1576 = vmatpush1.bf16.msra.mxu0 %v1447
    %1577 = vmatprep.subr.bf16.mxu0 0
    %1578 = vmatpush1.bf16.msra.mxu0 %v1446
    %1579 = vmatprep.subr.bf16.mxu0 0
    %1580 = vmatpush1.bf16.msra.mxu0 %v1445
    %1581 = vmatprep.subr.bf16.mxu0 0
    %1582 = vmatpush1.bf16.msra.mxu0 %v1444
    %1583 = vmatprep.subr.bf16.mxu0 0
    %1584 = vmatpush1.bf16.msra.mxu0 %v1443
    %1585 = vmatprep.subr.bf16.mxu0 0
    %1586 = vmatpush1.bf16.msra.mxu0 %v1442
    %1587 = vmatprep.subr.bf16.mxu0 0
    %1588 = vmatpush2.bf16.msra.mxu0 0
    %1589 = vmatprep.subr.bf16.mxu0 0
    %1590 = vmatpush2.bf16.msra.mxu0 0
    %1591 = vmatprep.subr.bf16.mxu0 0
    %1592 = vmatpush2.bf16.msra.mxu0 0
    %1593 = vmatprep.subr.bf16.mxu0 0
    %1594 = vmatpush2.bf16.msra.mxu0 0
    %1595 = vmatprep.subr.bf16.mxu0 0
    %1596 = vmatpush2.bf16.msra.mxu0 0
    %1597 = vmatprep.subr.bf16.mxu0 0
    %1598 = vmatpush2.bf16.msra.mxu0 0
    %1599 = vmatprep.subr.bf16.mxu0 0
    %1600 = vmatpush2.bf16.msra.mxu0 0
    %1601 = vmatprep.subr.bf16.mxu0 0
    %1602 = vmatpush2.bf16.msra.mxu0 0
    %1603 = vmatprep.mubr.bf16.mxu0 0
    %1604 = vmatmul.mubr.bf16.gmra.mxu0 %v1244
    %v1605 = vpop.f32.mrf.mxu0
    %v1606 = vadd.f32 %v1509, %v1605
    %v1607 = vpop.f32.mrf.mxu0
    %v1608 = vpop.f32.mrf.mxu0
    %v1609 = vadd.f32 %v1512, %v1608
    %v1610 = vpop.f32.mrf.mxu0
    %1611 = vmatprep.mubr.bf16.mxu0 0
    %1612 = vmatmul.mubr.bf16.gmra.mxu0 %v1247
    %v1613 = vpop.f32.mrf.mxu0
    %v1614 = vadd.f32 %v1517, %v1613
    %v1615 = vpop.f32.mrf.mxu0
    %v1616 = vpop.f32.mrf.mxu0
    %v1617 = vadd.f32 %v1520, %v1616
    %v1618 = vpop.f32.mrf.mxu0
    %1619 = vmatprep.mubr.bf16.mxu0 0
    %1620 = vmatmul.mubr.bf16.gmra.mxu0 %v1250
    %v1621 = vpop.f32.mrf.mxu0
    %v1622 = vadd.f32 %v1525, %v1621
    %v1623 = vpop.f32.mrf.mxu0
    %v1624 = vpop.f32.mrf.mxu0
    %v1625 = vadd.f32 %v1528, %v1624
    %v1626 = vpop.f32.mrf.mxu0
    %1627 = vmatprep.mubr.bf16.mxu0 0
    %1628 = vmatmul.mubr.bf16.gmra.mxu0 %v1253
    %v1629 = vpop.f32.mrf.mxu0
    %v1630 = vadd.f32 %v1533, %v1629
    %v1631 = vpop.f32.mrf.mxu0
    %v1632 = vpop.f32.mrf.mxu0
    %v1633 = vadd.f32 %v1536, %v1632
    %v1634 = vpop.f32.mrf.mxu0
    %1635 = vmatprep.mubr.bf16.mxu0 0
    %1636 = vmatmul.mubr.bf16.gmra.mxu0 %v1256
    %v1637 = vpop.f32.mrf.mxu0
    %v1638 = vadd.f32 %v1541, %v1637
    %v1639 = vpop.f32.mrf.mxu0
    %v1640 = vpop.f32.mrf.mxu0
    %v1641 = vadd.f32 %v1544, %v1640
    %v1642 = vpop.f32.mrf.mxu0
    %1643 = vmatprep.mubr.bf16.mxu0 0
    %1644 = vmatmul.mubr.bf16.gmra.mxu0 %v1259
    %v1645 = vpop.f32.mrf.mxu0
    %v1646 = vadd.f32 %v1549, %v1645
    %v1647 = vpop.f32.mrf.mxu0
    %v1648 = vpop.f32.mrf.mxu0
    %v1649 = vadd.f32 %v1552, %v1648
    %v1650 = vpop.f32.mrf.mxu0
    %1651 = vmatprep.mubr.bf16.mxu0 0
    %1652 = vmatmul.mubr.bf16.gmra.mxu0 %v1262
    %v1653 = vpop.f32.mrf.mxu0
    %v1654 = vadd.f32 %v1557, %v1653
    %v1655 = vpop.f32.mrf.mxu0
    %v1656 = vpop.f32.mrf.mxu0
    %v1657 = vadd.f32 %v1560, %v1656
    %v1658 = vpop.f32.mrf.mxu0
    %1659 = vmatprep.mubr.bf16.mxu0 0
    %1660 = vmatmul.mubr.bf16.gmra.mxu0 %v1265
    %v1661 = vpop.f32.mrf.mxu0
    %v1662 = vadd.f32 %v1565, %v1661
    %v1663 = vpop.f32.mrf.mxu0
    %v1664 = vpop.f32.mrf.mxu0
    %v1665 = vadd.f32 %v1568, %v1664
    %v1666 = vpop.f32.mrf.mxu0
    %1667 = vdwg.mxu0
    %v1668 = vadd.f32 %v1266, %v1606
    %v1669 = vadd.f32 %v1267, %v1609
    %v1670 = vadd.f32 %v1268, %v1614
    %v1671 = vadd.f32 %v1269, %v1617
    %v1672 = vadd.f32 %v1270, %v1622
    %v1673 = vadd.f32 %v1271, %v1625
    %v1674 = vadd.f32 %v1272, %v1630
    %v1675 = vadd.f32 %v1273, %v1633
    %v1676 = vadd.f32 %v1274, %v1638
    %v1677 = vadd.f32 %v1275, %v1641
    %v1678 = vadd.f32 %v1276, %v1646
    %v1679 = vadd.f32 %v1277, %v1649
    %v1680 = vadd.f32 %v1278, %v1654
    %v1681 = vadd.f32 %v1279, %v1657
    %v1682 = vadd.f32 %v1280, %v1662
    %v1683 = vadd.f32 %v1281, %v1665
    %1684 = vst [vmem:[#allocation2] sm:$0xff] %v1668
    %1685 = vst [vmem:[#allocation2 + $0x8] sm:$0xff] %v1669
    %1686 = vst [vmem:[#allocation2 + $0x10] sm:$0xff] %v1670
    %1687 = vst [vmem:[#allocation2 + $0x18] sm:$0xff] %v1671
    %1688 = vst [vmem:[#allocation2 + $0x20] sm:$0xff] %v1672
    %1689 = vst [vmem:[#allocation2 + $0x28] sm:$0xff] %v1673
    %1690 = vst [vmem:[#allocation2 + $0x30] sm:$0xff] %v1674
    %1691 = vst [vmem:[#allocation2 + $0x38] sm:$0xff] %v1675
    %1692 = vst [vmem:[#allocation2 + $0x40] sm:$0xff] %v1676
    %1693 = vst [vmem:[#allocation2 + $0x48] sm:$0xff] %v1677
    %1694 = vst [vmem:[#allocation2 + $0x50] sm:$0xff] %v1678
    %1695 = vst [vmem:[#allocation2 + $0x58] sm:$0xff] %v1679
    %1696 = vst [vmem:[#allocation2 + $0x60] sm:$0xff] %v1680
    %1697 = vst [vmem:[#allocation2 + $0x68] sm:$0xff] %v1681
    %1698 = vst [vmem:[#allocation2 + $0x70] sm:$0xff] %v1682
    %1699 = vst [vmem:[#allocation2 + $0x78] sm:$0xff] %v1683
    // Predicated region
    $region38: #{tpu_custom_call.1} parent=1 // pred_check
      %p1700 = pneg %p74
    $region39: #{tpu_custom_call.1} parent=1 // pred_check_branch
      %1702 = sbr.rel (%p1700) target = $region41
    $region40: #{tpu_custom_call.1} parent=1 // pred_region
      %v1703 = vld [vmem:[#allocation2] sm:$0xff]
      %v1704 = vld [vmem:[#allocation2 + $0x8] sm:$0xff]
      %v1705 = vld [vmem:[#allocation2 + $0x10] sm:$0xff]
      %v1706 = vld [vmem:[#allocation2 + $0x18] sm:$0xff]
      %v1707 = vld [vmem:[#allocation2 + $0x20] sm:$0xff]
      %v1708 = vld [vmem:[#allocation2 + $0x28] sm:$0xff]
      %v1709 = vld [vmem:[#allocation2 + $0x30] sm:$0xff]
      %v1710 = vld [vmem:[#allocation2 + $0x38] sm:$0xff]
      %v1711 = vld [vmem:[#allocation2 + $0x40] sm:$0xff]
      %v1712 = vld [vmem:[#allocation2 + $0x48] sm:$0xff]
      %v1713 = vld [vmem:[#allocation2 + $0x50] sm:$0xff]
      %v1714 = vld [vmem:[#allocation2 + $0x58] sm:$0xff]
      %v1715 = vld [vmem:[#allocation2 + $0x60] sm:$0xff]
      %v1716 = vld [vmem:[#allocation2 + $0x68] sm:$0xff]
      %v1717 = vld [vmem:[#allocation2 + $0x70] sm:$0xff]
      %v1718 = vld [vmem:[#allocation2 + $0x78] sm:$0xff]
      %1719 = vst [vmem:[#allocation11] sm:$0xff] %v1703
      %1720 = vst [vmem:[#allocation11 + $0x8] sm:$0xff] %v1704
      %1721 = vst [vmem:[#allocation11 + $0x10] sm:$0xff] %v1705
      %1722 = vst [vmem:[#allocation11 + $0x18] sm:$0xff] %v1706
      %1723 = vst [vmem:[#allocation11 + $0x20] sm:$0xff] %v1707
      %1724 = vst [vmem:[#allocation11 + $0x28] sm:$0xff] %v1708
      %1725 = vst [vmem:[#allocation11 + $0x30] sm:$0xff] %v1709
      %1726 = vst [vmem:[#allocation11 + $0x38] sm:$0xff] %v1710
      %1727 = vst [vmem:[#allocation11 + $0x40] sm:$0xff] %v1711
      %1728 = vst [vmem:[#allocation11 + $0x48] sm:$0xff] %v1712
      %1729 = vst [vmem:[#allocation11 + $0x50] sm:$0xff] %v1713
      %1730 = vst [vmem:[#allocation11 + $0x58] sm:$0xff] %v1714
      %1731 = vst [vmem:[#allocation11 + $0x60] sm:$0xff] %v1715
      %1732 = vst [vmem:[#allocation11 + $0x68] sm:$0xff] %v1716
      %1733 = vst [vmem:[#allocation11 + $0x70] sm:$0xff] %v1717
      %1734 = vst [vmem:[#allocation11 + $0x78] sm:$0xff] %v1718
    $region41: #{tpu_custom_call.1} parent=1 // pred_fallthru
      _
    // Predicated region
    $region42: #{tpu_custom_call.1} parent=1 // pred_check
      _
    $region43: #{tpu_custom_call.1} parent=1 // pred_check_branch
      %1736 = sbr.rel (0) target = $region45
    $region44: #{tpu_custom_call.1} parent=1 // pred_region
      %s1738 = ssub.s32 2048, 2048
      %1739 = vsyncadd [#allocation5], %s1738
      %s1740 = sshll.u32 [#allocation11], 4
      %s1741 = int_to_ptr.vmem [resolvable:$true] %s1740
      %1746 = dma.vmem_to_hbm [thread:$0]  %s1741, 2048, %s4, [#allocation5], 128, 128, 8
    $region45: #{tpu_custom_call.1} parent=1 // pred_fallthru
      _
    // Predicated region
    $region46: #{tpu_custom_call.1} parent=1 // pred_check
      _
    $region47: #{tpu_custom_call.1} parent=1 // pred_check_branch
      %1748 = sbr.rel (0) target = $region49
    $region48: #{tpu_custom_call.1} parent=1 // pred_region
      %1749 = dma.done [#allocation5], 2048
    $region49: #{tpu_custom_call.1} parent=1 // pred_fallthru
      _
    %1750 = vsyncpa [#allocation4], 1
    %1751 = vsyncpa [#allocation7], 1
    %1752 = vsyncpa [#allocation10], 1
    %1753 = vsyncpa [#allocation5], 1

</llo_original>
